<compile_context>
chip_gen: v6e
topology: v6e:2x2x1
jax: 0.10.0
libtpu: 0.0.40
codegen_flags: <defaults>
</compile_context>

<pallas_src>
import functools

import jax
import jax.numpy as jnp
from jax import lax
from jax.experimental import pallas as pl
from jax.experimental.pallas import tpu as pltpu


def _inverted_residual_kernel(
    x_ref, w1_ref, s1_ref, b1_ref, wdw_ref, s2_ref, b2_ref,
    w3_ref, s3_ref, b3_ref, o_ref, hp_ref, *, stride, use_residual):
  """Grid = (batch, output-row band). hp_ref is a per-image padded scratch."""
  _, H, W, cin_p = x_ref.shape
  chid_p = w1_ref.shape[1]
  cout_p = w3_ref.shape[1]
  _, tho, wo, _ = o_ref.shape
  b = pl.program_id(1)

  # ---- 1x1 expand conv (MXU, bf16 x bf16 -> f32) + BN + ReLU6 ---------------
  # Done once per image (band 0) into a zeroed VMEM scratch; the untouched
  # 1-element border of the scratch provides the depthwise conv's zero padding
  # (replaces the old broadcasted_iota/where mask and the wrapper-side pad).
  @pl.when(b == 0)
  def _():
    hp_ref[...] = jnp.zeros_like(hp_ref)
    x2d = x_ref[...].reshape(H * W, cin_p)                       # bf16
    h = jnp.dot(x2d, w1_ref[...], preferred_element_type=jnp.float32)
    h = jnp.clip(h * s1_ref[...] + b1_ref[...], 0.0, 6.0)        # f32 VPU math
    hp_ref[1:H + 1, 1:W + 1, :] = h.reshape(H, W, chid_p)

  # ---- 3x3 depthwise conv (VPU, f32) + BN + ReLU6 for this row band ---------
  r0 = b * tho * stride                       # first padded row of the band
  span_h = (tho - 1) * stride + 1
  span_w = (wo - 1) * stride + 1
  acc = jnp.zeros((tho, wo, chid_p), jnp.float32)
  for di in range(3):
    for dj in range(3):
      tap = hp_ref[pl.ds(r0 + di, span_h), pl.ds(dj, span_w), :]
      if stride > 1:
        # TODO(synk): for stride>1 replace this strided value slice with a
        # reshape-based subsample to avoid per-tap sublane relayout copies.
        tap = tap[::stride, ::stride, :]
      w_tap = wdw_ref[di * 3 + dj:di * 3 + dj + 1, :].reshape(1, 1, chid_p)
      acc = acc + tap * w_tap
  acc = acc * s2_ref[...].reshape(1, 1, chid_p) + b2_ref[...].reshape(1, 1, chid_p)
  acc = jnp.clip(acc, 0.0, 6.0)

  # ---- 1x1 project conv (MXU, bf16) + BN (+ residual) -----------------------
  y = jnp.dot(acc.reshape(tho * wo, chid_p).astype(jnp.bfloat16), w3_ref[...],
              preferred_element_type=jnp.float32)
  y = y * s3_ref[...] + b3_ref[...]
  if use_residual:  # stride == 1 and Cin == Cout, so padded widths match too.
    xb = x_ref[:, pl.ds(b * tho, tho), :, :].reshape(tho * W, cout_p)
    y = y + xb.astype(jnp.float32)
  # Lane-dense store: last dim is the padded (multiple-of-128) channel width.
  o_ref[...] = y.reshape(1, tho, wo, cout_p).astype(o_ref.dtype)


def inverted_residual_pallas(x_nchw, params, *, stride, out_channels,
                             block_rows=None):
  N, Cin, H, W = x_nchw.shape
  assert Cin == params["cin"]
  cin_p, chid_p, cout_p = params["cin_p"], params["chid_p"], params["cout_p"]
  use_residual = (stride == 1 and Cin == out_channels)
  Ho = (H + 2 - 3) // stride + 1
  Wo = (W + 2 - 3) // stride + 1

  # Output-row band that divides Ho: bounds live ranges and gives >N grid steps.
  if block_rows is None:
    block_rows = max(t for t in range(1, min(Ho, 8) + 1) if Ho % t == 0)
  assert Ho % block_rows == 0
  nb = Ho // block_rows

  # NCHW -> NHWC, zero-pad channels to the 128-lane width, bf16 for the MXU.
  # (No spatial halo pad here any more; the halo lives in the kernel scratch.)
  x = jnp.transpose(x_nchw, (0, 2, 3, 1))
  x = jnp.pad(x, ((0, 0), (0, 0), (0, 0), (0, cin_p - Cin))).astype(jnp.bfloat16)

  kernel = functools.partial(_inverted_residual_kernel, stride=stride,
                             use_residual=use_residual)

  # Constant index maps -> these operands are DMA'd once and stay resident
  # across all grid steps (no per-step re-fetch of weights / BN vectors).
  def wspec(shape):
    return pl.BlockSpec(shape, lambda n, b: (0,) * len(shape))

  out_padded = pl.pallas_call(
      kernel,
      out_shape=jax.ShapeDtypeStruct((N, Ho, Wo, cout_p), jnp.float32),
      grid_spec=pltpu.PrefetchScalarGridSpec(
          num_scalar_prefetch=0,
          grid=(N, nb),
          in_specs=[
              pl.BlockSpec((1, H, W, cin_p), lambda n, b: (n, 0, 0, 0)),
              wspec((cin_p, chid_p)),                    # w1 (bf16)
              wspec((1, chid_p)), wspec((1, chid_p)),    # s1, b1
              wspec((9, chid_p)),                        # depthwise taps (f32)
              wspec((1, chid_p)), wspec((1, chid_p)),    # s2, b2
              wspec((chid_p, cout_p)),                   # w3 (bf16)
              wspec((1, cout_p)), wspec((1, cout_p)),    # s3, b3
          ],
          out_specs=pl.BlockSpec((1, block_rows, Wo, cout_p),
                                 lambda n, b: (n, b, 0, 0)),
          scratch_shapes=[pltpu.VMEM((H + 2, W + 2, chid_p), jnp.float32)],
      ),
      compiler_params=pltpu.CompilerParams(
          dimension_semantics=("parallel", "arbitrary"),
          vmem_limit_bytes=32 * 1024 * 1024),
  )(x, params["w1"], params["s1"], params["b1"], params["wdw"],
    params["s2"], params["b2"], params["w3"], params["s3"], params["b3"])

  out = out_padded[..., :out_channels]          # drop channel padding
  return jnp.transpose(out, (0, 3, 1, 2))       # NHWC -> NCHW


def _round_up(v, m):
  return ((v + m - 1) // m) * m


def make_params(key, in_channels, out_channels, expand_ratio, eps=1e-5,
                lane=128):
  # TODO(synk): only the expand_ratio != 1 branch of the module is implemented
  # (the expand_ratio == 1 variant simply drops the first 1x1 conv stage).
  assert expand_ratio != 1
  chid = int(round(in_channels * expand_ratio))
  cin_p = _round_up(in_channels, lane)
  chid_p = _round_up(chid, lane)
  cout_p = _round_up(out_channels, lane)

  ks = jax.random.split(key, 6)
  w1_pt = 0.2 * jax.random.normal(ks[0], (chid, in_channels, 1, 1), jnp.float32)
  wdw_pt = 0.2 * jax.random.normal(ks[1], (chid, 1, 3, 3), jnp.float32)
  w3_pt = 0.2 * jax.random.normal(ks[2], (out_channels, chid, 1, 1), jnp.float32)

  def bn(k, c):
    k1, k2, k3, k4 = jax.random.split(k, 4)
    gamma = 1.0 + 0.1 * jax.random.normal(k1, (c,), jnp.float32)
    beta = 0.1 * jax.random.normal(k2, (c,), jnp.float32)
    mean = 0.1 * jax.random.normal(k3, (c,), jnp.float32)
    var = 0.5 + jnp.abs(jax.random.normal(k4, (c,), jnp.float32))
    scale = gamma / jnp.sqrt(var + eps)
    shift = beta - mean * scale
    return scale, shift

  s1, b1 = bn(ks[3], chid)
  s2, b2 = bn(ks[4], chid)
  s3, b3 = bn(ks[5], out_channels)

  def pad2(a, r, c):  # zero-pad a 2-D array up to (r, c)
    return jnp.pad(a, ((0, r - a.shape[0]), (0, c - a.shape[1])))

  w1 = pad2(jnp.transpose(w1_pt[:, :, 0, 0], (1, 0)), cin_p, chid_p)
  wdw = pad2(jnp.transpose(wdw_pt[:, 0, :, :], (1, 2, 0)).reshape(9, chid),
             9, chid_p)
  w3 = pad2(jnp.transpose(w3_pt[:, :, 0, 0], (1, 0)), chid_p, cout_p)
  row = lambda v, c: pad2(v.reshape(1, -1), 1, c).astype(jnp.float32)

  return dict(
      w1=w1.astype(jnp.bfloat16),
      s1=row(s1, chid_p), b1=row(b1, chid_p),
      wdw=wdw.astype(jnp.float32),
      s2=row(s2, chid_p), b2=row(b2, chid_p),
      w3=w3.astype(jnp.bfloat16),
      s3=row(s3, cout_p), b3=row(b3, cout_p),
      cin=in_channels, chid=chid, cout=out_channels,
      cin_p=cin_p, chid_p=chid_p, cout_p=cout_p)


def inverted_residual_ref(x_nchw, params, *, stride, out_channels):
  """Pure-JAX reference (lax convs) on the same bf16-rounded MXU operands."""
  cin, chid = params["cin"], params["chid"]
  w1 = params["w1"][:cin, :chid].astype(jnp.float32)
  wdw = params["wdw"][:, :chid]
  w3 = params["w3"][:chid, :out_channels].astype(jnp.float32)
  s1, b1 = params["s1"][0, :chid], params["b1"][0, :chid]
  s2, b2 = params["s2"][0, :chid], params["b2"][0, :chid]
  s3, b3 = params["s3"][0, :out_channels], params["b3"][0, :out_channels]

  x = jnp.transpose(x_nchw, (0, 2, 3, 1))
  xq = x.astype(jnp.bfloat16).astype(jnp.float32)   # match MXU input rounding
  dn = ("NHWC", "HWIO", "NHWC")
  h = lax.conv_general_dilated(xq, w1.reshape(1, 1, cin, chid), (1, 1),
                               "VALID", dimension_numbers=dn)
  h = jnp.clip(h * s1 + b1, 0.0, 6.0)
  h = lax.conv_general_dilated(h, wdw.reshape(3, 3, 1, chid), (stride, stride),
                               ((1, 1), (1, 1)), dimension_numbers=dn,
                               feature_group_count=chid)
  h = jnp.clip(h * s2 + b2, 0.0, 6.0)
  hq = h.astype(jnp.bfloat16).astype(jnp.float32)   # match project matmul cast
  y = lax.conv_general_dilated(hq, w3.reshape(1, 1, chid, out_channels),
                               (1, 1), "VALID", dimension_numbers=dn)
  y = y * s3 + b3
  if stride == 1 and cin == out_channels:
    y = y + xq
  return jnp.transpose(y, (0, 3, 1, 2))


if __name__ == "__main__":
  key = jax.random.PRNGKey(0)
  kx, kp = jax.random.split(key)
  N, Cin, H, W = 2, 4, 16, 16
  Cout, stride, expand_ratio = 4, 1, 6

  x = jax.random.normal(kx, (N, Cin, H, W), jnp.float32)
  params = make_params(kp, Cin, Cout, expand_ratio)

  out = inverted_residual_pallas(x, params, stride=stride, out_channels=Cout)
  out = jax.block_until_ready(out)

  ref = inverted_residual_ref(x, params, stride=stride, out_channels=Cout)
  assert out.shape == ref.shape == (N, Cout, H, W)
  err = float(jnp.max(jnp.abs(out - ref)))
  assert err < 2e-2, f"max abs err {err}"
  print("KERNEL_OK")
</pallas_src>

<mosaic_0001>
module attributes {stable_mosaic.version = 11 : i64} {
  func.func @_inverted_residual_kernel(%arg0: i32, %arg1: i32, %arg2: memref<1x16x16x128xbf16, #tpu.memory_space<vmem>>, %arg3: memref<128x128xbf16, #tpu.memory_space<vmem>>, %arg4: memref<1x128xf32, #tpu.memory_space<vmem>>, %arg5: memref<1x128xf32, #tpu.memory_space<vmem>>, %arg6: memref<9x128xf32, #tpu.memory_space<vmem>>, %arg7: memref<1x128xf32, #tpu.memory_space<vmem>>, %arg8: memref<1x128xf32, #tpu.memory_space<vmem>>, %arg9: memref<128x128xbf16, #tpu.memory_space<vmem>>, %arg10: memref<1x128xf32, #tpu.memory_space<vmem>>, %arg11: memref<1x128xf32, #tpu.memory_space<vmem>>, %arg12: memref<1x8x16x128xf32, #tpu.memory_space<vmem>>, %arg13: memref<18x18x128xf32, #tpu.memory_space<vmem>>) attributes {dimension_semantics = [#tpu.dimension_semantics<parallel>, #tpu.dimension_semantics<arbitrary>], iteration_bounds = array<i64: 2, 2>, scalar_prefetch = 0 : i64, scratch_operands = 1 : i64, tpu.core_type = #tpu.core_type<tc>, window_params = [{transform_indices = @transform_0, window_bounds = array<i64: 1, 16, 16, 128>}, {pipeline_mode = #tpu.pipeline_mode<synchronous>, transform_indices = @transform_1, window_bounds = array<i64: 128, 128>}, {pipeline_mode = #tpu.pipeline_mode<synchronous>, transform_indices = @transform_2, window_bounds = array<i64: 1, 128>}, {pipeline_mode = #tpu.pipeline_mode<synchronous>, transform_indices = @transform_3, window_bounds = array<i64: 1, 128>}, {pipeline_mode = #tpu.pipeline_mode<synchronous>, transform_indices = @transform_4, window_bounds = array<i64: 9, 128>}, {pipeline_mode = #tpu.pipeline_mode<synchronous>, transform_indices = @transform_5, window_bounds = array<i64: 1, 128>}, {pipeline_mode = #tpu.pipeline_mode<synchronous>, transform_indices = @transform_6, window_bounds = array<i64: 1, 128>}, {pipeline_mode = #tpu.pipeline_mode<synchronous>, transform_indices = @transform_7, window_bounds = array<i64: 128, 128>}, {pipeline_mode = #tpu.pipeline_mode<synchronous>, transform_indices = @transform_8, window_bounds = array<i64: 1, 128>}, {pipeline_mode = #tpu.pipeline_mode<synchronous>, transform_indices = @transform_9, window_bounds = array<i64: 1, 128>}, {transform_indices = @transform_10, window_bounds = array<i64: 1, 8, 16, 128>}]} {
    %c0_i32 = arith.constant 0 : i32
    %0 = arith.cmpi eq, %arg1, %c0_i32 : i32
    %1 = arith.extui %0 : i1 to i32
    %c0_i32_0 = arith.constant 0 : i32
    %2 = arith.cmpi ne, %1, %c0_i32_0 : i32
    scf.if %2 {
      %cst_57 = arith.constant 0.000000e+00 : f32
      %108 = vector.broadcast %cst_57 : f32 to vector<18x18x128xf32>
      %c0_58 = arith.constant 0 : index
      %c0_59 = arith.constant 0 : index
      %c0_60 = arith.constant 0 : index
      %109 = vector.load %arg13[%c0_58, %c0_59, %c0_60] : memref<18x18x128xf32, #tpu.memory_space<vmem>>, vector<18x18x128xf32>
      tpu.vector_store %arg13[%c0_58, %c0_59, %c0_60], %108 {strides = array<i32>} : memref<18x18x128xf32, #tpu.memory_space<vmem>>, vector<18x18x128xf32>,
      %c0_61 = arith.constant 0 : index
      %c0_62 = arith.constant 0 : index
      %c0_63 = arith.constant 0 : index
      %c0_64 = arith.constant 0 : index
      %110 = vector.load %arg2[%c0_61, %c0_62, %c0_63, %c0_64] : memref<1x16x16x128xbf16, #tpu.memory_space<vmem>>, vector<1x16x16x128xbf16>
      %111 = vector.shape_cast %110 : vector<1x16x16x128xbf16> to vector<256x128xbf16>
      %c0_65 = arith.constant 0 : index
      %c0_66 = arith.constant 0 : index
      %112 = vector.load %arg3[%c0_65, %c0_66] : memref<128x128xbf16, #tpu.memory_space<vmem>>, vector<128x128xbf16>
      %cst_67 = arith.constant dense<0.000000e+00> : vector<256x128xf32>
      %113 = tpu.matmul %111, %112, %cst_67 {dimension_numbers = #tpu.dot_dimension_numbers<[1], [0], [0], [1], [0, 0, 1, 1], [], []>} : vector<256x128xbf16>, vector<128x128xbf16>, vector<256x128xf32> -> vector<256x128xf32>
      %c0_68 = arith.constant 0 : index
      %c0_69 = arith.constant 0 : index
      %114 = vector.load %arg4[%c0_68, %c0_69] : memref<1x128xf32, #tpu.memory_space<vmem>>, vector<1x128xf32>
      %115 = vector.broadcast %114 : vector<1x128xf32> to vector<256x128xf32>
      %116 = arith.mulf %113, %115 : vector<256x128xf32>
      %c0_70 = arith.constant 0 : index
      %c0_71 = arith.constant 0 : index
      %117 = vector.load %arg5[%c0_70, %c0_71] : memref<1x128xf32, #tpu.memory_space<vmem>>, vector<1x128xf32>
      %118 = vector.broadcast %117 : vector<1x128xf32> to vector<256x128xf32>
      %119 = arith.addf %116, %118 : vector<256x128xf32>
      %cst_72 = arith.constant 0.000000e+00 : f32
      %cst_73 = arith.constant 6.000000e+00 : f32
      %120 = vector.broadcast %cst_72 : f32 to vector<256x128xf32>
      %121 = arith.maximumf %120, %119 : vector<256x128xf32>
      %122 = vector.broadcast %cst_73 : f32 to vector<256x128xf32>
      %123 = arith.minimumf %122, %121 : vector<256x128xf32>
      %124 = vector.shape_cast %123 : vector<256x128xf32> to vector<16x16x128xf32>
      %c1_74 = arith.constant 1 : index
      %c1_75 = arith.constant 1 : index
      %c0_76 = arith.constant 0 : index
      %125 = vector.load %arg13[%c1_74, %c1_75, %c0_76] : memref<18x18x128xf32, #tpu.memory_space<vmem>>, vector<16x16x128xf32>
      tpu.vector_store %arg13[%c1_74, %c1_75, %c0_76], %124 {strides = array<i32>} : memref<18x18x128xf32, #tpu.memory_space<vmem>>, vector<16x16x128xf32>,
    } else {
    }
    %c8_i32 = arith.constant 8 : i32
    %3 = arith.muli %arg1, %c8_i32 : i32
    %c1_i32 = arith.constant 1 : i32
    %4 = arith.muli %3, %c1_i32 : i32
    %cst = arith.constant 0.000000e+00 : f32
    %5 = vector.broadcast %cst : f32 to vector<8x16x128xf32>
    %c0_i32_1 = arith.constant 0 : i32
    %6 = arith.addi %4, %c0_i32_1 : i32
    %7 = arith.index_cast %6 : i32 to index
    %c0 = arith.constant 0 : index
    %c0_2 = arith.constant 0 : index
    %8 = vector.load %arg13[%7, %c0, %c0_2] : memref<18x18x128xf32, #tpu.memory_space<vmem>>, vector<8x16x128xf32>
    %c0_3 = arith.constant 0 : index
    %c0_4 = arith.constant 0 : index
    %9 = vector.load %arg6[%c0_3, %c0_4] : memref<9x128xf32, #tpu.memory_space<vmem>>, vector<1x128xf32>
    %10 = vector.shape_cast %9 : vector<1x128xf32> to vector<1x1x128xf32>
    %11 = vector.broadcast %10 : vector<1x1x128xf32> to vector<8x16x128xf32>
    %12 = arith.mulf %8, %11 : vector<8x16x128xf32>
    %13 = arith.addf %5, %12 : vector<8x16x128xf32>
    %c0_i32_5 = arith.constant 0 : i32
    %14 = arith.addi %4, %c0_i32_5 : i32
    %15 = arith.index_cast %14 : i32 to index
    %c1 = arith.constant 1 : index
    %c0_6 = arith.constant 0 : index
    %16 = vector.load %arg13[%15, %c1, %c0_6] : memref<18x18x128xf32, #tpu.memory_space<vmem>>, vector<8x16x128xf32>
    %c1_7 = arith.constant 1 : index
    %c0_8 = arith.constant 0 : index
    %17 = vector.load %arg6[%c1_7, %c0_8] : memref<9x128xf32, #tpu.memory_space<vmem>>, vector<1x128xf32>
    %18 = vector.shape_cast %17 : vector<1x128xf32> to vector<1x1x128xf32>
    %19 = vector.broadcast %18 : vector<1x1x128xf32> to vector<8x16x128xf32>
    %20 = arith.mulf %16, %19 : vector<8x16x128xf32>
    %21 = arith.addf %13, %20 : vector<8x16x128xf32>
    %c0_i32_9 = arith.constant 0 : i32
    %22 = arith.addi %4, %c0_i32_9 : i32
    %23 = arith.index_cast %22 : i32 to index
    %c2 = arith.constant 2 : index
    %c0_10 = arith.constant 0 : index
    %24 = vector.load %arg13[%23, %c2, %c0_10] : memref<18x18x128xf32, #tpu.memory_space<vmem>>, vector<8x16x128xf32>
    %c2_11 = arith.constant 2 : index
    %c0_12 = arith.constant 0 : index
    %25 = vector.load %arg6[%c2_11, %c0_12] : memref<9x128xf32, #tpu.memory_space<vmem>>, vector<1x128xf32>
    %26 = vector.shape_cast %25 : vector<1x128xf32> to vector<1x1x128xf32>
    %27 = vector.broadcast %26 : vector<1x1x128xf32> to vector<8x16x128xf32>
    %28 = arith.mulf %24, %27 : vector<8x16x128xf32>
    %29 = arith.addf %21, %28 : vector<8x16x128xf32>
    %c1_i32_13 = arith.constant 1 : i32
    %30 = arith.addi %4, %c1_i32_13 : i32
    %31 = arith.index_cast %30 : i32 to index
    %c0_14 = arith.constant 0 : index
    %c0_15 = arith.constant 0 : index
    %32 = vector.load %arg13[%31, %c0_14, %c0_15] : memref<18x18x128xf32, #tpu.memory_space<vmem>>, vector<8x16x128xf32>
    %c3 = arith.constant 3 : index
    %c0_16 = arith.constant 0 : index
    %33 = vector.load %arg6[%c3, %c0_16] : memref<9x128xf32, #tpu.memory_space<vmem>>, vector<1x128xf32>
    %34 = vector.shape_cast %33 : vector<1x128xf32> to vector<1x1x128xf32>
    %35 = vector.broadcast %34 : vector<1x1x128xf32> to vector<8x16x128xf32>
    %36 = arith.mulf %32, %35 : vector<8x16x128xf32>
    %37 = arith.addf %29, %36 : vector<8x16x128xf32>
    %c1_i32_17 = arith.constant 1 : i32
    %38 = arith.addi %4, %c1_i32_17 : i32
    %39 = arith.index_cast %38 : i32 to index
    %c1_18 = arith.constant 1 : index
    %c0_19 = arith.constant 0 : index
    %40 = vector.load %arg13[%39, %c1_18, %c0_19] : memref<18x18x128xf32, #tpu.memory_space<vmem>>, vector<8x16x128xf32>
    %c4 = arith.constant 4 : index
    %c0_20 = arith.constant 0 : index
    %41 = vector.load %arg6[%c4, %c0_20] : memref<9x128xf32, #tpu.memory_space<vmem>>, vector<1x128xf32>
    %42 = vector.shape_cast %41 : vector<1x128xf32> to vector<1x1x128xf32>
    %43 = vector.broadcast %42 : vector<1x1x128xf32> to vector<8x16x128xf32>
    %44 = arith.mulf %40, %43 : vector<8x16x128xf32>
    %45 = arith.addf %37, %44 : vector<8x16x128xf32>
    %c1_i32_21 = arith.constant 1 : i32
    %46 = arith.addi %4, %c1_i32_21 : i32
    %47 = arith.index_cast %46 : i32 to index
    %c2_22 = arith.constant 2 : index
    %c0_23 = arith.constant 0 : index
    %48 = vector.load %arg13[%47, %c2_22, %c0_23] : memref<18x18x128xf32, #tpu.memory_space<vmem>>, vector<8x16x128xf32>
    %c5 = arith.constant 5 : index
    %c0_24 = arith.constant 0 : index
    %49 = vector.load %arg6[%c5, %c0_24] : memref<9x128xf32, #tpu.memory_space<vmem>>, vector<1x128xf32>
    %50 = vector.shape_cast %49 : vector<1x128xf32> to vector<1x1x128xf32>
    %51 = vector.broadcast %50 : vector<1x1x128xf32> to vector<8x16x128xf32>
    %52 = arith.mulf %48, %51 : vector<8x16x128xf32>
    %53 = arith.addf %45, %52 : vector<8x16x128xf32>
    %c2_i32 = arith.constant 2 : i32
    %54 = arith.addi %4, %c2_i32 : i32
    %55 = arith.index_cast %54 : i32 to index
    %c0_25 = arith.constant 0 : index
    %c0_26 = arith.constant 0 : index
    %56 = vector.load %arg13[%55, %c0_25, %c0_26] : memref<18x18x128xf32, #tpu.memory_space<vmem>>, vector<8x16x128xf32>
    %c6 = arith.constant 6 : index
    %c0_27 = arith.constant 0 : index
    %57 = vector.load %arg6[%c6, %c0_27] : memref<9x128xf32, #tpu.memory_space<vmem>>, vector<1x128xf32>
    %58 = vector.shape_cast %57 : vector<1x128xf32> to vector<1x1x128xf32>
    %59 = vector.broadcast %58 : vector<1x1x128xf32> to vector<8x16x128xf32>
    %60 = arith.mulf %56, %59 : vector<8x16x128xf32>
    %61 = arith.addf %53, %60 : vector<8x16x128xf32>
    %c2_i32_28 = arith.constant 2 : i32
    %62 = arith.addi %4, %c2_i32_28 : i32
    %63 = arith.index_cast %62 : i32 to index
    %c1_29 = arith.constant 1 : index
    %c0_30 = arith.constant 0 : index
    %64 = vector.load %arg13[%63, %c1_29, %c0_30] : memref<18x18x128xf32, #tpu.memory_space<vmem>>, vector<8x16x128xf32>
    %c7 = arith.constant 7 : index
    %c0_31 = arith.constant 0 : index
    %65 = vector.load %arg6[%c7, %c0_31] : memref<9x128xf32, #tpu.memory_space<vmem>>, vector<1x128xf32>
    %66 = vector.shape_cast %65 : vector<1x128xf32> to vector<1x1x128xf32>
    %67 = vector.broadcast %66 : vector<1x1x128xf32> to vector<8x16x128xf32>
    %68 = arith.mulf %64, %67 : vector<8x16x128xf32>
    %69 = arith.addf %61, %68 : vector<8x16x128xf32>
    %c2_i32_32 = arith.constant 2 : i32
    %70 = arith.addi %4, %c2_i32_32 : i32
    %71 = arith.index_cast %70 : i32 to index
    %c2_33 = arith.constant 2 : index
    %c0_34 = arith.constant 0 : index
    %72 = vector.load %arg13[%71, %c2_33, %c0_34] : memref<18x18x128xf32, #tpu.memory_space<vmem>>, vector<8x16x128xf32>
    %c8 = arith.constant 8 : index
    %c0_35 = arith.constant 0 : index
    %73 = vector.load %arg6[%c8, %c0_35] : memref<9x128xf32, #tpu.memory_space<vmem>>, vector<1x128xf32>
    %74 = vector.shape_cast %73 : vector<1x128xf32> to vector<1x1x128xf32>
    %75 = vector.broadcast %74 : vector<1x1x128xf32> to vector<8x16x128xf32>
    %76 = arith.mulf %72, %75 : vector<8x16x128xf32>
    %77 = arith.addf %69, %76 : vector<8x16x128xf32>
    %c0_36 = arith.constant 0 : index
    %c0_37 = arith.constant 0 : index
    %78 = vector.load %arg7[%c0_36, %c0_37] : memref<1x128xf32, #tpu.memory_space<vmem>>, vector<1x128xf32>
    %79 = vector.shape_cast %78 : vector<1x128xf32> to vector<1x1x128xf32>
    %80 = vector.broadcast %79 : vector<1x1x128xf32> to vector<8x16x128xf32>
    %81 = arith.mulf %77, %80 : vector<8x16x128xf32>
    %c0_38 = arith.constant 0 : index
    %c0_39 = arith.constant 0 : index
    %82 = vector.load %arg8[%c0_38, %c0_39] : memref<1x128xf32, #tpu.memory_space<vmem>>, vector<1x128xf32>
    %83 = vector.shape_cast %82 : vector<1x128xf32> to vector<1x1x128xf32>
    %84 = vector.broadcast %83 : vector<1x1x128xf32> to vector<8x16x128xf32>
    %85 = arith.addf %81, %84 : vector<8x16x128xf32>
    %cst_40 = arith.constant 0.000000e+00 : f32
    %cst_41 = arith.constant 6.000000e+00 : f32
    %86 = vector.broadcast %cst_40 : f32 to vector<8x16x128xf32>
    %87 = arith.maximumf %86, %85 : vector<8x16x128xf32>
    %88 = vector.broadcast %cst_41 : f32 to vector<8x16x128xf32>
    %89 = arith.minimumf %88, %87 : vector<8x16x128xf32>
    %90 = vector.shape_cast %89 : vector<8x16x128xf32> to vector<128x128xf32>
    %91 = arith.truncf %90 : vector<128x128xf32> to vector<128x128xbf16>
    %c0_42 = arith.constant 0 : index
    %c0_43 = arith.constant 0 : index
    %92 = vector.load %arg9[%c0_42, %c0_43] : memref<128x128xbf16, #tpu.memory_space<vmem>>, vector<128x128xbf16>
    %cst_44 = arith.constant dense<0.000000e+00> : vector<128x128xf32>
    %93 = tpu.matmul %91, %92, %cst_44 {dimension_numbers = #tpu.dot_dimension_numbers<[1], [0], [0], [1], [0, 0, 1, 1], [], []>} : vector<128x128xbf16>, vector<128x128xbf16>, vector<128x128xf32> -> vector<128x128xf32>
    %c0_45 = arith.constant 0 : index
    %c0_46 = arith.constant 0 : index
    %94 = vector.load %arg10[%c0_45, %c0_46] : memref<1x128xf32, #tpu.memory_space<vmem>>, vector<1x128xf32>
    %95 = vector.broadcast %94 : vector<1x128xf32> to vector<128x128xf32>
    %96 = arith.mulf %93, %95 : vector<128x128xf32>
    %c0_47 = arith.constant 0 : index
    %c0_48 = arith.constant 0 : index
    %97 = vector.load %arg11[%c0_47, %c0_48] : memref<1x128xf32, #tpu.memory_space<vmem>>, vector<1x128xf32>
    %98 = vector.broadcast %97 : vector<1x128xf32> to vector<128x128xf32>
    %99 = arith.addf %96, %98 : vector<128x128xf32>
    %c8_i32_49 = arith.constant 8 : i32
    %100 = arith.muli %arg1, %c8_i32_49 : i32
    %c0_50 = arith.constant 0 : index
    %101 = arith.index_cast %100 : i32 to index
    %c0_51 = arith.constant 0 : index
    %c0_52 = arith.constant 0 : index
    %102 = vector.load %arg2[%c0_50, %101, %c0_51, %c0_52] : memref<1x16x16x128xbf16, #tpu.memory_space<vmem>>, vector<1x8x16x128xbf16>
    %103 = vector.shape_cast %102 : vector<1x8x16x128xbf16> to vector<128x128xbf16>
    %104 = arith.extf %103 : vector<128x128xbf16> to vector<128x128xf32>
    %105 = arith.addf %99, %104 : vector<128x128xf32>
    %106 = vector.shape_cast %105 : vector<128x128xf32> to vector<1x8x16x128xf32>
    %c0_53 = arith.constant 0 : index
    %c0_54 = arith.constant 0 : index
    %c0_55 = arith.constant 0 : index
    %c0_56 = arith.constant 0 : index
    %107 = vector.load %arg12[%c0_53, %c0_54, %c0_55, %c0_56] : memref<1x8x16x128xf32, #tpu.memory_space<vmem>>, vector<1x8x16x128xf32>
    tpu.vector_store %arg12[%c0_53, %c0_54, %c0_55, %c0_56], %106 {strides = array<i32>} : memref<1x8x16x128xf32, #tpu.memory_space<vmem>>, vector<1x8x16x128xf32>,
    return
  }
  func.func @transform_0(%arg0: i32, %arg1: i32) -> (i32, i32, i32, i32) {
    %c0_i32 = arith.constant 0 : i32
    %c0_i32_0 = arith.constant 0 : i32
    %c0_i32_1 = arith.constant 0 : i32
    %c0_i32_2 = arith.constant 0 : i32
    return %arg0, %c0_i32, %c0_i32_0, %c0_i32_1 : i32, i32, i32, i32
  }
  func.func @transform_1(%arg0: i32, %arg1: i32) -> (i32, i32) {
    %c0_i32 = arith.constant 0 : i32
    %c0_i32_0 = arith.constant 0 : i32
    %c0_i32_1 = arith.constant 0 : i32
    return %c0_i32, %c0_i32_0 : i32, i32
  }
  func.func @transform_2(%arg0: i32, %arg1: i32) -> (i32, i32) {
    %c0_i32 = arith.constant 0 : i32
    %c0_i32_0 = arith.constant 0 : i32
    %c0_i32_1 = arith.constant 0 : i32
    return %c0_i32, %c0_i32_0 : i32, i32
  }
  func.func @transform_3(%arg0: i32, %arg1: i32) -> (i32, i32) {
    %c0_i32 = arith.constant 0 : i32
    %c0_i32_0 = arith.constant 0 : i32
    %c0_i32_1 = arith.constant 0 : i32
    return %c0_i32, %c0_i32_0 : i32, i32
  }
  func.func @transform_4(%arg0: i32, %arg1: i32) -> (i32, i32) {
    %c0_i32 = arith.constant 0 : i32
    %c0_i32_0 = arith.constant 0 : i32
    %c0_i32_1 = arith.constant 0 : i32
    return %c0_i32, %c0_i32_0 : i32, i32
  }
  func.func @transform_5(%arg0: i32, %arg1: i32) -> (i32, i32) {
    %c0_i32 = arith.constant 0 : i32
    %c0_i32_0 = arith.constant 0 : i32
    %c0_i32_1 = arith.constant 0 : i32
    return %c0_i32, %c0_i32_0 : i32, i32
  }
  func.func @transform_6(%arg0: i32, %arg1: i32) -> (i32, i32) {
    %c0_i32 = arith.constant 0 : i32
    %c0_i32_0 = arith.constant 0 : i32
    %c0_i32_1 = arith.constant 0 : i32
    return %c0_i32, %c0_i32_0 : i32, i32
  }
  func.func @transform_7(%arg0: i32, %arg1: i32) -> (i32, i32) {
    %c0_i32 = arith.constant 0 : i32
    %c0_i32_0 = arith.constant 0 : i32
    %c0_i32_1 = arith.constant 0 : i32
    return %c0_i32, %c0_i32_0 : i32, i32
  }
  func.func @transform_8(%arg0: i32, %arg1: i32) -> (i32, i32) {
    %c0_i32 = arith.constant 0 : i32
    %c0_i32_0 = arith.constant 0 : i32
    %c0_i32_1 = arith.constant 0 : i32
    return %c0_i32, %c0_i32_0 : i32, i32
  }
  func.func @transform_9(%arg0: i32, %arg1: i32) -> (i32, i32) {
    %c0_i32 = arith.constant 0 : i32
    %c0_i32_0 = arith.constant 0 : i32
    %c0_i32_1 = arith.constant 0 : i32
    return %c0_i32, %c0_i32_0 : i32, i32
  }
  func.func @transform_10(%arg0: i32, %arg1: i32) -> (i32, i32, i32, i32) {
    %c0_i32 = arith.constant 0 : i32
    %c0_i32_0 = arith.constant 0 : i32
    %c0_i32_1 = arith.constant 0 : i32
    return %arg0, %arg1, %c0_i32, %c0_i32_0 : i32, i32, i32, i32
  }
}

</mosaic_0001>

<llo_original>
// kernel: tpu_custom_call.1
$region0: #{tpu_custom_call.1}
  #allocation0 [shape = 'u32[]', space=smem, size = 0x4, offset = 0x4, fixed_abs, tag = 'smem constant byte address 0x4 - core index']
  #allocation1 [shape = 'u32[144,128]{1,0:T(1,128)}', space=vmem, size = 0x12000, scoped, tag = 'internal scratch']
  #allocation2 [shape = 'f32[18,18,128]{2,1,0:T(8,128)}', space=vmem, size = 0x36000, scoped, tag = 'scratch operand']
  %s0 = inlined_call_operand.hbm [shape: bf16[2,16,16,128], index: 0, kind: input, shape index: {}]
  %s1 = inlined_call_operand.hbm [shape: bf16[128,128], index: 1, kind: input, shape index: {}]
  %s2 = inlined_call_operand.vmem [shape: f32[1,128], index: 2, kind: input, shape index: {}]
  %s3 = inlined_call_operand.vmem [shape: f32[1,128], index: 3, kind: input, shape index: {}]
  %s4 = inlined_call_operand.hbm [shape: f32[9,128], index: 4, kind: input, shape index: {}]
  %s5 = inlined_call_operand.vmem [shape: f32[1,128], index: 5, kind: input, shape index: {}]
  %s6 = inlined_call_operand.vmem [shape: f32[1,128], index: 6, kind: input, shape index: {}]
  %s7 = inlined_call_operand.hbm [shape: bf16[128,128], index: 7, kind: input, shape index: {}]
  %s8 = inlined_call_operand.vmem [shape: f32[1,128], index: 8, kind: input, shape index: {}]
  %s9 = inlined_call_operand.vmem [shape: f32[1,128], index: 9, kind: input, shape index: {}]
  %s10 = inlined_call_operand.hbm [shape: f32[2,16,16,128], index: 10, kind: output, shape index: {}]
  %s11 = sld [smem:[#allocation0]]
  $region93: #{tpu_custom_call.1} parent=0
    _
  %s13 = ssub.s32 1, %s11
  %s14 = scalar_select 0, %s13, %s11
  $region1: #{tpu_custom_call.1} parent=0
    #allocation3 [shape = 'u8[131072]{0}', space=vmem, size = 0x20000, scoped, tag = 'input window, operand 0']
    #allocation4 [shape = 's32[2]{0}', space=sflag, size = 0x8, scoped, tag = 'scoped memory for tpu_custom_call.1']
    #allocation5 [shape = 's32[2]{0}', space=sflag, size = 0x8, scoped, tag = 'scoped memory for tpu_custom_call.1']
    #allocation6 [shape = 'u8[32768]{0}', space=vmem, size = 0x8000, scoped, tag = 'input window, operand 1, single buffered']
    #allocation7 [shape = 's32[1]{0}', space=sflag, size = 0x4, scoped, tag = 'scoped memory for tpu_custom_call.1']
    #allocation8 [shape = 'u8[8192]{0}', space=vmem, size = 0x2000, scoped, tag = 'input window, operand 4, single buffered']
    #allocation9 [shape = 'u8[32768]{0}', space=vmem, size = 0x8000, scoped, tag = 'input window, operand 7, single buffered']
    #allocation10 [shape = 's32[1]{0}', space=sflag, size = 0x4, scoped, tag = 'scoped memory for tpu_custom_call.1']
    #allocation11 [shape = 'u8[131072]{0}', space=vmem, size = 0x20000, scoped, tag = 'output window, operand 0']
    %15 = vsyncpa [#allocation4], 0
    %s16 = scalar_lea.sflag [#allocation4], 1
    %17 = vsyncpa %s16, 0
    %18 = vsyncpa [#allocation7], 0
    %19 = vsyncpa [#allocation10], 0
    %20 = vsyncpa [#allocation5], 0
    %s21 = scalar_lea.sflag [#allocation5], 1
    %22 = vsyncpa %s21, 0
    loop: start=0, step=1, limit=6
    $region2: #{tpu_custom_call.1} parent=1 // loop_pre_header
      _
    $region3: #{tpu_custom_call.1} parent=1 // loop_header
      %s24 = sphi 0, %s28
      %p25 = scmp.ge.s32.totalorder %s24, 6
      %s31 = sphi 0, %s43
      %s32 = sphi 0, %s39
      %s33 = sphi 0, %s31
      %s34 = sphi 0, %s32
      %s35 = sphi 0, %s33
      %s36 = sphi 0, %s34
      %s46 = sphi 0, %s48
      %s49 = sphi 0, %s46
      %s50 = sphi 0, %s49
      %s66 = sphi 0, %s50
      %s70 = sphi 0, %s70
      %s72 = sphi 0, %s70
      %s73 = sphi 0, %s72
      %s87 = sphi 0, %s73
      %s91 = sphi 0, %s91
      %s93 = sphi 0, %s91
      %s94 = sphi 0, %s93
      %s108 = sphi 0, %s94
      %s112 = sphi 0, %s112
      %s114 = sphi 0, %s112
      %s115 = sphi 0, %s114
      %s129 = sphi 0, %s115
      %s133 = sphi 0, %s133
      %s135 = sphi 0, %s133
      %s136 = sphi 0, %s135
      %s150 = sphi 0, %s136
      %s154 = sphi 0, %s154
      %s156 = sphi 0, %s154
      %s157 = sphi 0, %s156
      %s171 = sphi 0, %s157
      %s175 = sphi 0, %s175
      %s177 = sphi 0, %s175
      %s178 = sphi 0, %s177
      %s192 = sphi 0, %s178
      %s196 = sphi 0, %s196
      %s198 = sphi 0, %s196
      %s199 = sphi 0, %s198
      %s213 = sphi 0, %s199
      %s217 = sphi 0, %s217
      %s219 = sphi 0, %s217
      %s220 = sphi 0, %s219
      %s234 = sphi 0, %s220
      %s238 = sphi 0, %s238
      %s240 = sphi 0, %s238
      %s241 = sphi 0, %s240
      %s255 = sphi 0, %s241
      %s263 = sphi 0, %s265
      %s266 = sphi 0, %s263
      %s267 = sphi 0, %s266
      %s283 = sphi 0, %s267
    $region4: #{tpu_custom_call.1} parent=1 // loop_header_branch
      %27 = sbr.rel (%p25) target = $region8
    $region5: #{tpu_custom_call.1} parent=1 // loop_body
      %s29 = ssub.s32 %s24, 1
      %s30 = ssub.s32 %s24, 2
      %s37 = sadd.s32 1, %s32
      %p38 = scmp.ge.s32.totalorder %s37, 2
      %s39 = scalar_select %p38, 0, %s37
      %s40 = sadd.s32 1, %s31
      %s41 = scalar_select %p38, %s40, %s31
      %p42 = scmp.ge.s32.totalorder %s41, 2
      %s43 = scalar_select %p42, 0, %s41
      %s44 = ssub.s32 %s31, %s43
      %p45 = scmp.eq.s32.totalorder %s44, 0
      %s47 = sadd.s32 %s46, 1
      %s48 = scalar_select %p45, %s46, %s47
      %p51 = pneg %p45
      %p52 = scmp.eq.s32.totalorder %s24, 3
      %p53 = por %p51, %p52
      %p54 = scmp.ne.s32.totalorder %s46, %s49
      %p55 = scmp.eq.s32.totalorder %s24, 0
      %p56 = por %p54, %p55
      %p57 = scmp.ne.s32.totalorder %s46, %s49
      %p58 = scmp.eq.s32.totalorder %s29, 3
      %p59 = por %p57, %p58
      %p60 = scmp.ne.s32.totalorder %s49, %s50
      %p61 = scmp.eq.s32.totalorder %s29, 0
      %p62 = por %p60, %p61
      %p63 = scmp.ne.s32.totalorder %s49, %s50
      %p64 = scmp.eq.s32.totalorder %s30, 3
      %p65 = por %p63, %p64
      %p67 = scmp.ne.s32.totalorder %s50, %s66
      %p68 = scmp.eq.s32.totalorder %s30, 0
      %p69 = por %p67, %p68
      %s71 = sadd.s32 %s70, 1
      %p74 = scmp.eq.s32.totalorder %s24, 3
      %p75 = scmp.ne.s32.totalorder %s70, %s72
      %p76 = scmp.eq.s32.totalorder %s24, 0
      %p77 = por %p75, %p76
      %p78 = scmp.ne.s32.totalorder %s70, %s72
      %p79 = scmp.eq.s32.totalorder %s29, 3
      %p80 = por %p78, %p79
      %p81 = scmp.ne.s32.totalorder %s72, %s73
      %p82 = scmp.eq.s32.totalorder %s29, 0
      %p83 = por %p81, %p82
      %p84 = scmp.ne.s32.totalorder %s72, %s73
      %p85 = scmp.eq.s32.totalorder %s30, 3
      %p86 = por %p84, %p85
      %p88 = scmp.ne.s32.totalorder %s73, %s87
      %p89 = scmp.eq.s32.totalorder %s30, 0
      %p90 = por %p88, %p89
      %s92 = sadd.s32 %s91, 1
      %p95 = scmp.eq.s32.totalorder %s24, 3
      %p96 = scmp.ne.s32.totalorder %s91, %s93
      %p97 = scmp.eq.s32.totalorder %s24, 0
      %p98 = por %p96, %p97
      %p99 = scmp.ne.s32.totalorder %s91, %s93
      %p100 = scmp.eq.s32.totalorder %s29, 3
      %p101 = por %p99, %p100
      %p102 = scmp.ne.s32.totalorder %s93, %s94
      %p103 = scmp.eq.s32.totalorder %s29, 0
      %p104 = por %p102, %p103
      %p105 = scmp.ne.s32.totalorder %s93, %s94
      %p106 = scmp.eq.s32.totalorder %s30, 3
      %p107 = por %p105, %p106
      %p109 = scmp.ne.s32.totalorder %s94, %s108
      %p110 = scmp.eq.s32.totalorder %s30, 0
      %p111 = por %p109, %p110
      %s113 = sadd.s32 %s112, 1
      %p116 = scmp.eq.s32.totalorder %s24, 3
      %p117 = scmp.ne.s32.totalorder %s112, %s114
      %p118 = scmp.eq.s32.totalorder %s24, 0
      %p119 = por %p117, %p118
      %p120 = scmp.ne.s32.totalorder %s112, %s114
      %p121 = scmp.eq.s32.totalorder %s29, 3
      %p122 = por %p120, %p121
      %p123 = scmp.ne.s32.totalorder %s114, %s115
      %p124 = scmp.eq.s32.totalorder %s29, 0
      %p125 = por %p123, %p124
      %p126 = scmp.ne.s32.totalorder %s114, %s115
      %p127 = scmp.eq.s32.totalorder %s30, 3
      %p128 = por %p126, %p127
      %p130 = scmp.ne.s32.totalorder %s115, %s129
      %p131 = scmp.eq.s32.totalorder %s30, 0
      %p132 = por %p130, %p131
      %s134 = sadd.s32 %s133, 1
      %p137 = scmp.eq.s32.totalorder %s24, 3
      %p138 = scmp.ne.s32.totalorder %s133, %s135
      %p139 = scmp.eq.s32.totalorder %s24, 0
      %p140 = por %p138, %p139
      %p141 = scmp.ne.s32.totalorder %s133, %s135
      %p142 = scmp.eq.s32.totalorder %s29, 3
      %p143 = por %p141, %p142
      %p144 = scmp.ne.s32.totalorder %s135, %s136
      %p145 = scmp.eq.s32.totalorder %s29, 0
      %p146 = por %p144, %p145
      %p147 = scmp.ne.s32.totalorder %s135, %s136
      %p148 = scmp.eq.s32.totalorder %s30, 3
      %p149 = por %p147, %p148
      %p151 = scmp.ne.s32.totalorder %s136, %s150
      %p152 = scmp.eq.s32.totalorder %s30, 0
      %p153 = por %p151, %p152
      %s155 = sadd.s32 %s154, 1
      %p158 = scmp.eq.s32.totalorder %s24, 3
      %p159 = scmp.ne.s32.totalorder %s154, %s156
      %p160 = scmp.eq.s32.totalorder %s24, 0
      %p161 = por %p159, %p160
      %p162 = scmp.ne.s32.totalorder %s154, %s156
      %p163 = scmp.eq.s32.totalorder %s29, 3
      %p164 = por %p162, %p163
      %p165 = scmp.ne.s32.totalorder %s156, %s157
      %p166 = scmp.eq.s32.totalorder %s29, 0
      %p167 = por %p165, %p166
      %p168 = scmp.ne.s32.totalorder %s156, %s157
      %p169 = scmp.eq.s32.totalorder %s30, 3
      %p170 = por %p168, %p169
      %p172 = scmp.ne.s32.totalorder %s157, %s171
      %p173 = scmp.eq.s32.totalorder %s30, 0
      %p174 = por %p172, %p173
      %s176 = sadd.s32 %s175, 1
      %p179 = scmp.eq.s32.totalorder %s24, 3
      %p180 = scmp.ne.s32.totalorder %s175, %s177
      %p181 = scmp.eq.s32.totalorder %s24, 0
      %p182 = por %p180, %p181
      %p183 = scmp.ne.s32.totalorder %s175, %s177
      %p184 = scmp.eq.s32.totalorder %s29, 3
      %p185 = por %p183, %p184
      %p186 = scmp.ne.s32.totalorder %s177, %s178
      %p187 = scmp.eq.s32.totalorder %s29, 0
      %p188 = por %p186, %p187
      %p189 = scmp.ne.s32.totalorder %s177, %s178
      %p190 = scmp.eq.s32.totalorder %s30, 3
      %p191 = por %p189, %p190
      %p193 = scmp.ne.s32.totalorder %s178, %s192
      %p194 = scmp.eq.s32.totalorder %s30, 0
      %p195 = por %p193, %p194
      %s197 = sadd.s32 %s196, 1
      %p200 = scmp.eq.s32.totalorder %s24, 3
      %p201 = scmp.ne.s32.totalorder %s196, %s198
      %p202 = scmp.eq.s32.totalorder %s24, 0
      %p203 = por %p201, %p202
      %p204 = scmp.ne.s32.totalorder %s196, %s198
      %p205 = scmp.eq.s32.totalorder %s29, 3
      %p206 = por %p204, %p205
      %p207 = scmp.ne.s32.totalorder %s198, %s199
      %p208 = scmp.eq.s32.totalorder %s29, 0
      %p209 = por %p207, %p208
      %p210 = scmp.ne.s32.totalorder %s198, %s199
      %p211 = scmp.eq.s32.totalorder %s30, 3
      %p212 = por %p210, %p211
      %p214 = scmp.ne.s32.totalorder %s199, %s213
      %p215 = scmp.eq.s32.totalorder %s30, 0
      %p216 = por %p214, %p215
      %s218 = sadd.s32 %s217, 1
      %p221 = scmp.eq.s32.totalorder %s24, 3
      %p222 = scmp.ne.s32.totalorder %s217, %s219
      %p223 = scmp.eq.s32.totalorder %s24, 0
      %p224 = por %p222, %p223
      %p225 = scmp.ne.s32.totalorder %s217, %s219
      %p226 = scmp.eq.s32.totalorder %s29, 3
      %p227 = por %p225, %p226
      %p228 = scmp.ne.s32.totalorder %s219, %s220
      %p229 = scmp.eq.s32.totalorder %s29, 0
      %p230 = por %p228, %p229
      %p231 = scmp.ne.s32.totalorder %s219, %s220
      %p232 = scmp.eq.s32.totalorder %s30, 3
      %p233 = por %p231, %p232
      %p235 = scmp.ne.s32.totalorder %s220, %s234
      %p236 = scmp.eq.s32.totalorder %s30, 0
      %p237 = por %p235, %p236
      %s239 = sadd.s32 %s238, 1
      %p242 = scmp.eq.s32.totalorder %s24, 3
      %p243 = scmp.ne.s32.totalorder %s238, %s240
      %p244 = scmp.eq.s32.totalorder %s24, 0
      %p245 = por %p243, %p244
      %p246 = scmp.ne.s32.totalorder %s238, %s240
      %p247 = scmp.eq.s32.totalorder %s29, 3
      %p248 = por %p246, %p247
      %p249 = scmp.ne.s32.totalorder %s240, %s241
      %p250 = scmp.eq.s32.totalorder %s29, 0
      %p251 = por %p249, %p250
      %p252 = scmp.ne.s32.totalorder %s240, %s241
      %p253 = scmp.eq.s32.totalorder %s30, 3
      %p254 = por %p252, %p253
      %p256 = scmp.ne.s32.totalorder %s241, %s255
      %p257 = scmp.eq.s32.totalorder %s30, 0
      %p258 = por %p256, %p257
      %s259 = ssub.s32 %s31, %s43
      %s260 = ssub.s32 %s32, %s39
      %s261 = sor.u32 %s259, %s260
      %p262 = scmp.eq.s32.totalorder %s261, 0
      %s264 = sadd.s32 %s263, 1
      %s265 = scalar_select %p262, %s263, %s264
      %p268 = pneg %p262
      %p269 = scmp.eq.s32.totalorder %s24, 3
      %p270 = por %p268, %p269
      %p271 = scmp.ne.s32.totalorder %s263, %s266
      %p272 = scmp.eq.s32.totalorder %s24, 0
      %p273 = por %p271, %p272
      %p274 = scmp.ne.s32.totalorder %s263, %s266
      %p275 = scmp.eq.s32.totalorder %s29, 3
      %p276 = por %p274, %p275
      %p277 = scmp.ne.s32.totalorder %s266, %s267
      %p278 = scmp.eq.s32.totalorder %s29, 0
      %p279 = por %p277, %p278
      %p280 = scmp.ne.s32.totalorder %s266, %s267
      %p281 = scmp.eq.s32.totalorder %s30, 3
      %p282 = por %p280, %p281
      %p284 = scmp.ne.s32.totalorder %s267, %s283
      %p285 = scmp.eq.s32.totalorder %s30, 0
      %p286 = por %p284, %p285
      %p287 = scmp.le.s32.totalorder 1, %s24
      %p288 = scmp.lt.s32.totalorder %s24, 5
      %p289 = pnand %p287, %p288
      %p290 = pneg %p289
      // Predicated region
      $region9: #{tpu_custom_call.1} parent=5 // pred_check
        _
      $region10: #{tpu_custom_call.1} parent=5 // pred_check_branch
        %292 = sbr.rel (%p289) target = $region12
      $region11: #{tpu_custom_call.1} parent=5 // pred_region
        %s293 = ssub.s32 %s24, 1
        // Predicated region
        $region13: #{tpu_custom_call.1} parent=11 // pred_check
          %p294 = pneg %p83
        $region14: #{tpu_custom_call.1} parent=11 // pred_check_branch
          %296 = sbr.rel (%p294) target = $region16
        $region15: #{tpu_custom_call.1} parent=11 // pred_region
          %s298 = ssub.s32 1024, 1024
          %299 = vsyncadd [#allocation7], %s298
          %s300 = sshll.u32 [#allocation6], 4
          %s301 = int_to_ptr.vmem [resolvable:$true] %s300
          %306 = dma.hbm_to_vmem [thread:$0]  %s1, 1024, %s301, [#allocation7], 64, 64, 4
        $region16: #{tpu_custom_call.1} parent=11 // pred_fallthru
          _
        // Predicated region
        $region17: #{tpu_custom_call.1} parent=11 // pred_check
          %p307 = pneg %p104
        $region18: #{tpu_custom_call.1} parent=11 // pred_check_branch
          %309 = sbr.rel (%p307) target = $region20
        $region19: #{tpu_custom_call.1} parent=11 // pred_region
          _
        $region20: #{tpu_custom_call.1} parent=11 // pred_fallthru
          _
        // Predicated region
        $region21: #{tpu_custom_call.1} parent=11 // pred_check
          %p310 = pneg %p125
        $region22: #{tpu_custom_call.1} parent=11 // pred_check_branch
          %312 = sbr.rel (%p310) target = $region24
        $region23: #{tpu_custom_call.1} parent=11 // pred_region
          _
        $region24: #{tpu_custom_call.1} parent=11 // pred_fallthru
          _
        // Predicated region
        $region25: #{tpu_custom_call.1} parent=11 // pred_check
          %p313 = pneg %p146
        $region26: #{tpu_custom_call.1} parent=11 // pred_check_branch
          %315 = sbr.rel (%p313) target = $region28
        $region27: #{tpu_custom_call.1} parent=11 // pred_region
          %s317 = ssub.s32 256, 256
          %318 = vsyncadd [#allocation7], %s317
          %s319 = sshll.u32 [#allocation8], 4
          %s320 = int_to_ptr.vmem [resolvable:$true] %s319
          %325 = dma.hbm_to_vmem [thread:$0]  %s4, 256, %s320, [#allocation7], 128, 128, 8
        $region28: #{tpu_custom_call.1} parent=11 // pred_fallthru
          _
        // Predicated region
        $region29: #{tpu_custom_call.1} parent=11 // pred_check
          %p326 = pneg %p167
        $region30: #{tpu_custom_call.1} parent=11 // pred_check_branch
          %328 = sbr.rel (%p326) target = $region32
        $region31: #{tpu_custom_call.1} parent=11 // pred_region
          _
        $region32: #{tpu_custom_call.1} parent=11 // pred_fallthru
          _
        // Predicated region
        $region33: #{tpu_custom_call.1} parent=11 // pred_check
          %p329 = pneg %p188
        $region34: #{tpu_custom_call.1} parent=11 // pred_check_branch
          %331 = sbr.rel (%p329) target = $region36
        $region35: #{tpu_custom_call.1} parent=11 // pred_region
          _
        $region36: #{tpu_custom_call.1} parent=11 // pred_fallthru
          _
        // Predicated region
        $region37: #{tpu_custom_call.1} parent=11 // pred_check
          %p332 = pneg %p209
        $region38: #{tpu_custom_call.1} parent=11 // pred_check_branch
          %334 = sbr.rel (%p332) target = $region40
        $region39: #{tpu_custom_call.1} parent=11 // pred_region
          %s336 = ssub.s32 1024, 1024
          %337 = vsyncadd [#allocation10], %s336
          %s338 = sshll.u32 [#allocation9], 4
          %s339 = int_to_ptr.vmem [resolvable:$true] %s338
          %344 = dma.hbm_to_vmem [thread:$0]  %s7, 1024, %s339, [#allocation10], 64, 64, 4
        $region40: #{tpu_custom_call.1} parent=11 // pred_fallthru
          _
        // Predicated region
        $region41: #{tpu_custom_call.1} parent=11 // pred_check
          %p345 = pneg %p230
        $region42: #{tpu_custom_call.1} parent=11 // pred_check_branch
          %347 = sbr.rel (%p345) target = $region44
        $region43: #{tpu_custom_call.1} parent=11 // pred_region
          _
        $region44: #{tpu_custom_call.1} parent=11 // pred_fallthru
          _
        // Predicated region
        $region45: #{tpu_custom_call.1} parent=11 // pred_check
          %p348 = pneg %p251
        $region46: #{tpu_custom_call.1} parent=11 // pred_check_branch
          %350 = sbr.rel (%p348) target = $region48
        $region47: #{tpu_custom_call.1} parent=11 // pred_region
          _
        $region48: #{tpu_custom_call.1} parent=11 // pred_fallthru
          _
      $region12: #{tpu_custom_call.1} parent=5 // pred_fallthru
        _
      %p351 = scmp.lt.s32.totalorder %s24, 4
      // Predicated region
      $region49: #{tpu_custom_call.1} parent=5 // pred_check
        %p352 = pneg %p351
      $region50: #{tpu_custom_call.1} parent=5 // pred_check_branch
        %354 = sbr.rel (%p352) target = $region52
      $region51: #{tpu_custom_call.1} parent=5 // pred_region
        // Predicated region
        $region53: #{tpu_custom_call.1} parent=51 // pred_check
          %p355 = pneg %p56
        $region54: #{tpu_custom_call.1} parent=51 // pred_check_branch
          %357 = sbr.rel (%p355) target = $region56
        $region55: #{tpu_custom_call.1} parent=51 // pred_region
          %s358 = sand.u32 %s46, 1
          %s359 = scalar_lea.sflag [#allocation4], %s358
          %s360 = sand.u32 %s46, 1
          %s361 = smul.addr %s360, 128
          %s362 = scalar_lea.vmem [#allocation3], %s361
          %s364 = ssub.s32 2048, 2048
          %365 = vsyncadd %s359, %s364
          %s366 = smul.addr %s31, 32
          %s367 = smul.addr %s366, 64
          %s368 = scalar_lea.hbm %s0, %s367
          %s369 = sshll.u32 %s362, 4
          %s370 = int_to_ptr.vmem [resolvable:$true] %s369
          %375 = dma.hbm_to_vmem [thread:$0]  %s368, 2048, %s370, %s359, 64, 64, 4
        $region56: #{tpu_custom_call.1} parent=51 // pred_fallthru
          _
      $region52: #{tpu_custom_call.1} parent=5 // pred_fallthru
        _
      %p376 = scmp.le.s32.totalorder 1, %s24
      %p377 = scmp.lt.s32.totalorder %s24, 5
      %p378 = pnand %p376, %p377
      %p379 = pneg %p378
      // Predicated region
      $region57: #{tpu_custom_call.1} parent=5 // pred_check
        _
      $region58: #{tpu_custom_call.1} parent=5 // pred_check_branch
        %381 = sbr.rel (%p378) target = $region60
      $region59: #{tpu_custom_call.1} parent=5 // pred_region
        %s382 = ssub.s32 %s24, 1
        %s383 = sand.u32 %s49, 1
        %s384 = scalar_lea.sflag [#allocation4], %s383
        %s385 = sand.u32 %s49, 1
        %s386 = smul.addr %s385, 128
        %s387 = scalar_lea.vmem [#allocation3], %s386
        // Predicated region
        $region61: #{tpu_custom_call.1} parent=59 // pred_check
          %p388 = pneg %p62
        $region62: #{tpu_custom_call.1} parent=59 // pred_check_branch
          %390 = sbr.rel (%p388) target = $region64
        $region63: #{tpu_custom_call.1} parent=59 // pred_region
          %391 = dma.done %s384, 2048
        $region64: #{tpu_custom_call.1} parent=59 // pred_fallthru
          _
        // Predicated region
        $region65: #{tpu_custom_call.1} parent=59 // pred_check
          %p392 = pneg %p83
        $region66: #{tpu_custom_call.1} parent=59 // pred_check_branch
          %394 = sbr.rel (%p392) target = $region68
        $region67: #{tpu_custom_call.1} parent=59 // pred_region
          %395 = dma.done [#allocation7], 1024
        $region68: #{tpu_custom_call.1} parent=59 // pred_fallthru
          _
        // Predicated region
        $region69: #{tpu_custom_call.1} parent=59 // pred_check
          %p396 = pneg %p146
        $region70: #{tpu_custom_call.1} parent=59 // pred_check_branch
          %398 = sbr.rel (%p396) target = $region72
        $region71: #{tpu_custom_call.1} parent=59 // pred_region
          %399 = dma.done [#allocation7], 256
        $region72: #{tpu_custom_call.1} parent=59 // pred_fallthru
          _
        // Predicated region
        $region73: #{tpu_custom_call.1} parent=59 // pred_check
          %p400 = pneg %p209
        $region74: #{tpu_custom_call.1} parent=59 // pred_check_branch
          %402 = sbr.rel (%p400) target = $region76
        $region75: #{tpu_custom_call.1} parent=59 // pred_region
          %403 = dma.done [#allocation10], 1024
        $region76: #{tpu_custom_call.1} parent=59 // pred_fallthru
          _
        %s404 = sand.u32 %s49, 1
        %s405 = scalar_lea.sflag [#allocation4], %s404
        %s406 = sand.u32 %s49, 1
        %s407 = smul.addr %s406, 128
        %s408 = scalar_lea.vmem [#allocation3], %s407
        %p409 = pneg %p62
        %p410 = pneg %p59
        %p411 = pneg %p83
        %p412 = pneg %p80
        %p413 = pneg %p104
        %p414 = pneg %p101
        %p415 = pneg %p125
        %p416 = pneg %p122
        %p417 = pneg %p146
        %p418 = pneg %p143
        %p419 = pneg %p167
        %p420 = pneg %p164
        %p421 = pneg %p188
        %p422 = pneg %p185
        %p423 = pneg %p209
        %p424 = pneg %p206
        %p425 = pneg %p230
        %p426 = pneg %p227
        %p427 = pneg %p251
        %p428 = pneg %p248
        %p429 = pneg %p279
        %p430 = pneg %p276
        %s431 = sand.u32 %s266, 1
        %s432 = scalar_lea.sflag [#allocation5], %s431
        %s433 = sand.u32 %s266, 1
        %s434 = smul.addr %s433, 128
        %s435 = scalar_lea.vmem [#allocation11], %s434
        %s436 = smul.u32 8, %s34
        %p438 = scmp.eq.s32.totalorder %s34, 0
        // Predicated region
        $region77: #{tpu_custom_call.1} parent=59 // pred_check
          %p439 = pneg %p438
        $region78: #{tpu_custom_call.1} parent=59 // pred_check_branch
          %441 = sbr.rel (%p439) target = $region80
        $region79: #{tpu_custom_call.1} parent=59 // pred_region
          %442 = vst [vmem:[#allocation2] sm:$0xff] 0.0
          %443 = vst [vmem:[#allocation2 + $0x8] sm:$0xff] 0.0
          %444 = vst [vmem:[#allocation2 + $0x10] sm:$0x3] 0.0
          %445 = vst [vmem:[#allocation2 + $0x18] sm:$0xff] 0.0
          %446 = vst [vmem:[#allocation2 + $0x20] sm:$0xff] 0.0
          %447 = vst [vmem:[#allocation2 + $0x28] sm:$0x3] 0.0
          %448 = vst [vmem:[#allocation2 + $0x30] sm:$0xff] 0.0
          %449 = vst [vmem:[#allocation2 + $0x38] sm:$0xff] 0.0
          %450 = vst [vmem:[#allocation2 + $0x40] sm:$0x3] 0.0
          %451 = vst [vmem:[#allocation2 + $0x48] sm:$0xff] 0.0
          %452 = vst [vmem:[#allocation2 + $0x50] sm:$0xff] 0.0
          %453 = vst [vmem:[#allocation2 + $0x58] sm:$0x3] 0.0
          %454 = vst [vmem:[#allocation2 + $0x60] sm:$0xff] 0.0
          %455 = vst [vmem:[#allocation2 + $0x68] sm:$0xff] 0.0
          %456 = vst [vmem:[#allocation2 + $0x70] sm:$0x3] 0.0
          %457 = vst [vmem:[#allocation2 + $0x78] sm:$0xff] 0.0
          %458 = vst [vmem:[#allocation2 + $0x80] sm:$0xff] 0.0
          %459 = vst [vmem:[#allocation2 + $0x88] sm:$0x3] 0.0
          %460 = vst [vmem:[#allocation2 + $0x90] sm:$0xff] 0.0
          %461 = vst [vmem:[#allocation2 + $0x98] sm:$0xff] 0.0
          %462 = vst [vmem:[#allocation2 + $0xa0] sm:$0x3] 0.0
          %463 = vst [vmem:[#allocation2 + $0xa8] sm:$0xff] 0.0
          %464 = vst [vmem:[#allocation2 + $0xb0] sm:$0xff] 0.0
          %465 = vst [vmem:[#allocation2 + $0xb8] sm:$0x3] 0.0
          %466 = vst [vmem:[#allocation2 + $0xc0] sm:$0xff] 0.0
          %467 = vst [vmem:[#allocation2 + $0xc8] sm:$0xff] 0.0
          %468 = vst [vmem:[#allocation2 + $0xd0] sm:$0x3] 0.0
          %469 = vst [vmem:[#allocation2 + $0xd8] sm:$0xff] 0.0
          %470 = vst [vmem:[#allocation2 + $0xe0] sm:$0xff] 0.0
          %471 = vst [vmem:[#allocation2 + $0xe8] sm:$0x3] 0.0
          %472 = vst [vmem:[#allocation2 + $0xf0] sm:$0xff] 0.0
          %473 = vst [vmem:[#allocation2 + $0xf8] sm:$0xff] 0.0
          %474 = vst [vmem:[#allocation2 + $0x100] sm:$0x3] 0.0
          %475 = vst [vmem:[#allocation2 + $0x108] sm:$0xff] 0.0
          %476 = vst [vmem:[#allocation2 + $0x110] sm:$0xff] 0.0
          %477 = vst [vmem:[#allocation2 + $0x118] sm:$0x3] 0.0
          %478 = vst [vmem:[#allocation2 + $0x120] sm:$0xff] 0.0
          %479 = vst [vmem:[#allocation2 + $0x128] sm:$0xff] 0.0
          %480 = vst [vmem:[#allocation2 + $0x130] sm:$0x3] 0.0
          %481 = vst [vmem:[#allocation2 + $0x138] sm:$0xff] 0.0
          %482 = vst [vmem:[#allocation2 + $0x140] sm:$0xff] 0.0
          %483 = vst [vmem:[#allocation2 + $0x148] sm:$0x3] 0.0
          %484 = vst [vmem:[#allocation2 + $0x150] sm:$0xff] 0.0
          %485 = vst [vmem:[#allocation2 + $0x158] sm:$0xff] 0.0
          %486 = vst [vmem:[#allocation2 + $0x160] sm:$0x3] 0.0
          %487 = vst [vmem:[#allocation2 + $0x168] sm:$0xff] 0.0
          %488 = vst [vmem:[#allocation2 + $0x170] sm:$0xff] 0.0
          %489 = vst [vmem:[#allocation2 + $0x178] sm:$0x3] 0.0
          %490 = vst [vmem:[#allocation2 + $0x180] sm:$0xff] 0.0
          %491 = vst [vmem:[#allocation2 + $0x188] sm:$0xff] 0.0
          %492 = vst [vmem:[#allocation2 + $0x190] sm:$0x3] 0.0
          %493 = vst [vmem:[#allocation2 + $0x198] sm:$0xff] 0.0
          %494 = vst [vmem:[#allocation2 + $0x1a0] sm:$0xff] 0.0
          %495 = vst [vmem:[#allocation2 + $0x1a8] sm:$0x3] 0.0
          %v496 = vld [vmem:[%s387] sm:$0xf]
          %v497 = vld [vmem:[%s387 + $0x4] sm:$0xf]
          %v498 = vld [vmem:[%s387 + $0x8] sm:$0xf]
          %v499 = vld [vmem:[%s387 + $0xc] sm:$0xf]
          %v500 = vld [vmem:[%s387 + $0x10] sm:$0xf]
          %v501 = vld [vmem:[%s387 + $0x14] sm:$0xf]
          %v502 = vld [vmem:[%s387 + $0x18] sm:$0xf]
          %v503 = vld [vmem:[%s387 + $0x1c] sm:$0xf]
          %v504 = vld [vmem:[%s387 + $0x20] sm:$0xf]
          %v505 = vld [vmem:[%s387 + $0x24] sm:$0xf]
          %v506 = vld [vmem:[%s387 + $0x28] sm:$0xf]
          %v507 = vld [vmem:[%s387 + $0x2c] sm:$0xf]
          %v508 = vld [vmem:[%s387 + $0x30] sm:$0xf]
          %v509 = vld [vmem:[%s387 + $0x34] sm:$0xf]
          %v510 = vld [vmem:[%s387 + $0x38] sm:$0xf]
          %v511 = vld [vmem:[%s387 + $0x3c] sm:$0xf]
          %v512 = vld [vmem:[%s387 + $0x40] sm:$0xf]
          %v513 = vld [vmem:[%s387 + $0x44] sm:$0xf]
          %v514 = vld [vmem:[%s387 + $0x48] sm:$0xf]
          %v515 = vld [vmem:[%s387 + $0x4c] sm:$0xf]
          %v516 = vld [vmem:[%s387 + $0x50] sm:$0xf]
          %v517 = vld [vmem:[%s387 + $0x54] sm:$0xf]
          %v518 = vld [vmem:[%s387 + $0x58] sm:$0xf]
          %v519 = vld [vmem:[%s387 + $0x5c] sm:$0xf]
          %v520 = vld [vmem:[%s387 + $0x60] sm:$0xf]
          %v521 = vld [vmem:[%s387 + $0x64] sm:$0xf]
          %v522 = vld [vmem:[%s387 + $0x68] sm:$0xf]
          %v523 = vld [vmem:[%s387 + $0x6c] sm:$0xf]
          %v524 = vld [vmem:[%s387 + $0x70] sm:$0xf]
          %v525 = vld [vmem:[%s387 + $0x74] sm:$0xf]
          %v526 = vld [vmem:[%s387 + $0x78] sm:$0xf]
          %v527 = vld [vmem:[%s387 + $0x7c] sm:$0xf]
          %v528 = vld [vmem:[#allocation6] sm:$0xf]
          %v529 = vld [vmem:[#allocation6 + $0x4] sm:$0xf]
          %v530 = vld [vmem:[#allocation6 + $0x8] sm:$0xf]
          %v531 = vld [vmem:[#allocation6 + $0xc] sm:$0xf]
          %v532 = vld [vmem:[#allocation6 + $0x10] sm:$0xf]
          %v533 = vld [vmem:[#allocation6 + $0x14] sm:$0xf]
          %v534 = vld [vmem:[#allocation6 + $0x18] sm:$0xf]
          %v535 = vld [vmem:[#allocation6 + $0x1c] sm:$0xf]
          %v536 = vld [vmem:[#allocation6 + $0x20] sm:$0xf]
          %v537 = vld [vmem:[#allocation6 + $0x24] sm:$0xf]
          %v538 = vld [vmem:[#allocation6 + $0x28] sm:$0xf]
          %v539 = vld [vmem:[#allocation6 + $0x2c] sm:$0xf]
          %v540 = vld [vmem:[#allocation6 + $0x30] sm:$0xf]
          %v541 = vld [vmem:[#allocation6 + $0x34] sm:$0xf]
          %v542 = vld [vmem:[#allocation6 + $0x38] sm:$0xf]
          %v543 = vld [vmem:[#allocation6 + $0x3c] sm:$0xf]
          %v576 = vunpack.c.l.b16 %v496
          %v577 = vunpack.c.l.b16 %v497
          %v578 = vunpack.c.l.b16 %v498
          %v579 = vunpack.c.l.b16 %v499
          %v580 = vunpack.c.l.b16 %v500
          %v581 = vunpack.c.l.b16 %v501
          %v582 = vunpack.c.l.b16 %v502
          %v583 = vunpack.c.l.b16 %v503
          %v584 = vunpack.c.l.b16 %v504
          %v585 = vunpack.c.l.b16 %v505
          %v586 = vunpack.c.l.b16 %v506
          %v587 = vunpack.c.l.b16 %v507
          %v588 = vunpack.c.l.b16 %v508
          %v589 = vunpack.c.l.b16 %v509
          %v590 = vunpack.c.l.b16 %v510
          %v591 = vunpack.c.l.b16 %v511
          %v592 = vunpack.c.l.b16 %v512
          %v593 = vunpack.c.l.b16 %v513
          %v594 = vunpack.c.l.b16 %v514
          %v595 = vunpack.c.l.b16 %v515
          %v596 = vunpack.c.l.b16 %v516
          %v597 = vunpack.c.l.b16 %v517
          %v598 = vunpack.c.l.b16 %v518
          %v599 = vunpack.c.l.b16 %v519
          %v600 = vunpack.c.l.b16 %v520
          %v601 = vunpack.c.l.b16 %v521
          %v602 = vunpack.c.l.b16 %v522
          %v603 = vunpack.c.l.b16 %v523
          %v604 = vunpack.c.l.b16 %v524
          %v605 = vunpack.c.l.b16 %v525
          %v606 = vunpack.c.l.b16 %v526
          %v607 = vunpack.c.l.b16 %v527
          %v608 = vpack.c.b16 %v577, %v576
          %v609 = vpack.c.b16 %v579, %v578
          %v610 = vpack.c.b16 %v581, %v580
          %v611 = vpack.c.b16 %v583, %v582
          %v612 = vpack.c.b16 %v585, %v584
          %v613 = vpack.c.b16 %v587, %v586
          %v614 = vpack.c.b16 %v589, %v588
          %v615 = vpack.c.b16 %v591, %v590
          %v616 = vpack.c.b16 %v593, %v592
          %v617 = vpack.c.b16 %v595, %v594
          %v618 = vpack.c.b16 %v597, %v596
          %v619 = vpack.c.b16 %v599, %v598
          %v620 = vpack.c.b16 %v601, %v600
          %v621 = vpack.c.b16 %v603, %v602
          %v622 = vpack.c.b16 %v605, %v604
          %v623 = vpack.c.b16 %v607, %v606
          %v656 = vunpack.c.l.b16 %v528
          %v657 = vunpack.c.l.b16 %v529
          %v658 = vunpack.c.l.b16 %v530
          %v659 = vunpack.c.l.b16 %v531
          %v660 = vunpack.c.l.b16 %v532
          %v661 = vunpack.c.l.b16 %v533
          %v662 = vunpack.c.l.b16 %v534
          %v663 = vunpack.c.l.b16 %v535
          %v664 = vunpack.c.l.b16 %v536
          %v665 = vunpack.c.l.b16 %v537
          %v666 = vunpack.c.l.b16 %v538
          %v667 = vunpack.c.l.b16 %v539
          %v668 = vunpack.c.l.b16 %v540
          %v669 = vunpack.c.l.b16 %v541
          %v670 = vunpack.c.l.b16 %v542
          %v671 = vunpack.c.l.b16 %v543
          %v672 = vpack.c.b16 %v657, %v656
          %v673 = vpack.c.b16 %v659, %v658
          %v674 = vpack.c.b16 %v661, %v660
          %v675 = vpack.c.b16 %v663, %v662
          %v676 = vpack.c.b16 %v665, %v664
          %v677 = vpack.c.b16 %v667, %v666
          %v678 = vpack.c.b16 %v669, %v668
          %v679 = vpack.c.b16 %v671, %v670
          %688 = vmatprep.subr.bf16.mxu0 0
          %689 = vmatpush1.bf16.msra.mxu0 %v679
          %690 = vmatprep.subr.bf16.mxu0 0
          %691 = vmatpush1.bf16.msra.mxu0 %v678
          %692 = vmatprep.subr.bf16.mxu0 0
          %693 = vmatpush1.bf16.msra.mxu0 %v677
          %694 = vmatprep.subr.bf16.mxu0 0
          %695 = vmatpush1.bf16.msra.mxu0 %v676
          %696 = vmatprep.subr.bf16.mxu0 0
          %697 = vmatpush1.bf16.msra.mxu0 %v675
          %698 = vmatprep.subr.bf16.mxu0 0
          %699 = vmatpush1.bf16.msra.mxu0 %v674
          %700 = vmatprep.subr.bf16.mxu0 0
          %701 = vmatpush1.bf16.msra.mxu0 %v673
          %702 = vmatprep.subr.bf16.mxu0 0
          %703 = vmatpush1.bf16.msra.mxu0 %v672
          %704 = vmatprep.subr.bf16.mxu0 0
          %705 = vmatpush2.bf16.msra.mxu0 0
          %706 = vmatprep.subr.bf16.mxu0 0
          %707 = vmatpush2.bf16.msra.mxu0 0
          %708 = vmatprep.subr.bf16.mxu0 0
          %709 = vmatpush2.bf16.msra.mxu0 0
          %710 = vmatprep.subr.bf16.mxu0 0
          %711 = vmatpush2.bf16.msra.mxu0 0
          %712 = vmatprep.subr.bf16.mxu0 0
          %713 = vmatpush2.bf16.msra.mxu0 0
          %714 = vmatprep.subr.bf16.mxu0 0
          %715 = vmatpush2.bf16.msra.mxu0 0
          %716 = vmatprep.subr.bf16.mxu0 0
          %717 = vmatpush2.bf16.msra.mxu0 0
          %718 = vmatprep.subr.bf16.mxu0 0
          %719 = vmatpush2.bf16.msra.mxu0 0
          %720 = vmatprep.mubr.bf16.mxu0 0
          %721 = vmatmul.mubr.bf16.gmra.mxu0 %v608
          %v722 = vpop.f32.mrf.mxu0
          %v723 = vadd.f32 0.0, %v722
          %v724 = vpop.f32.mrf.mxu0
          %v725 = vpop.f32.mrf.mxu0
          %v726 = vadd.f32 0.0, %v725
          %v727 = vpop.f32.mrf.mxu0
          %728 = vmatprep.mubr.bf16.mxu0 0
          %729 = vmatmul.mubr.bf16.gmra.mxu0 %v609
          %v730 = vpop.f32.mrf.mxu0
          %v731 = vadd.f32 0.0, %v730
          %v732 = vpop.f32.mrf.mxu0
          %v733 = vpop.f32.mrf.mxu0
          %v734 = vadd.f32 0.0, %v733
          %v735 = vpop.f32.mrf.mxu0
          %736 = vmatprep.mubr.bf16.mxu0 0
          %737 = vmatmul.mubr.bf16.gmra.mxu0 %v610
          %v738 = vpop.f32.mrf.mxu0
          %v739 = vadd.f32 0.0, %v738
          %v740 = vpop.f32.mrf.mxu0
          %v741 = vpop.f32.mrf.mxu0
          %v742 = vadd.f32 0.0, %v741
          %v743 = vpop.f32.mrf.mxu0
          %744 = vmatprep.mubr.bf16.mxu0 0
          %745 = vmatmul.mubr.bf16.gmra.mxu0 %v611
          %v746 = vpop.f32.mrf.mxu0
          %v747 = vadd.f32 0.0, %v746
          %v748 = vpop.f32.mrf.mxu0
          %v749 = vpop.f32.mrf.mxu0
          %v750 = vadd.f32 0.0, %v749
          %v751 = vpop.f32.mrf.mxu0
          %752 = vmatprep.mubr.bf16.mxu0 0
          %753 = vmatmul.mubr.bf16.gmra.mxu0 %v612
          %v754 = vpop.f32.mrf.mxu0
          %v755 = vadd.f32 0.0, %v754
          %v756 = vpop.f32.mrf.mxu0
          %v757 = vpop.f32.mrf.mxu0
          %v758 = vadd.f32 0.0, %v757
          %v759 = vpop.f32.mrf.mxu0
          %760 = vmatprep.mubr.bf16.mxu0 0
          %761 = vmatmul.mubr.bf16.gmra.mxu0 %v613
          %v762 = vpop.f32.mrf.mxu0
          %v763 = vadd.f32 0.0, %v762
          %v764 = vpop.f32.mrf.mxu0
          %v765 = vpop.f32.mrf.mxu0
          %v766 = vadd.f32 0.0, %v765
          %v767 = vpop.f32.mrf.mxu0
          %768 = vmatprep.mubr.bf16.mxu0 0
          %769 = vmatmul.mubr.bf16.gmra.mxu0 %v614
          %v770 = vpop.f32.mrf.mxu0
          %v771 = vadd.f32 0.0, %v770
          %v772 = vpop.f32.mrf.mxu0
          %v773 = vpop.f32.mrf.mxu0
          %v774 = vadd.f32 0.0, %v773
          %v775 = vpop.f32.mrf.mxu0
          %776 = vmatprep.mubr.bf16.mxu0 0
          %777 = vmatmul.mubr.bf16.gmra.mxu0 %v615
          %v778 = vpop.f32.mrf.mxu0
          %v779 = vadd.f32 0.0, %v778
          %v780 = vpop.f32.mrf.mxu0
          %v781 = vpop.f32.mrf.mxu0
          %v782 = vadd.f32 0.0, %v781
          %v783 = vpop.f32.mrf.mxu0
          %784 = vmatprep.mubr.bf16.mxu0 0
          %785 = vmatmul.mubr.bf16.gmra.mxu0 %v616
          %v786 = vpop.f32.mrf.mxu0
          %v787 = vadd.f32 0.0, %v786
          %v788 = vpop.f32.mrf.mxu0
          %v789 = vpop.f32.mrf.mxu0
          %v790 = vadd.f32 0.0, %v789
          %v791 = vpop.f32.mrf.mxu0
          %792 = vmatprep.mubr.bf16.mxu0 0
          %793 = vmatmul.mubr.bf16.gmra.mxu0 %v617
          %v794 = vpop.f32.mrf.mxu0
          %v795 = vadd.f32 0.0, %v794
          %v796 = vpop.f32.mrf.mxu0
          %v797 = vpop.f32.mrf.mxu0
          %v798 = vadd.f32 0.0, %v797
          %v799 = vpop.f32.mrf.mxu0
          %800 = vmatprep.mubr.bf16.mxu0 0
          %801 = vmatmul.mubr.bf16.gmra.mxu0 %v618
          %v802 = vpop.f32.mrf.mxu0
          %v803 = vadd.f32 0.0, %v802
          %v804 = vpop.f32.mrf.mxu0
          %v805 = vpop.f32.mrf.mxu0
          %v806 = vadd.f32 0.0, %v805
          %v807 = vpop.f32.mrf.mxu0
          %808 = vmatprep.mubr.bf16.mxu0 0
          %809 = vmatmul.mubr.bf16.gmra.mxu0 %v619
          %v810 = vpop.f32.mrf.mxu0
          %v811 = vadd.f32 0.0, %v810
          %v812 = vpop.f32.mrf.mxu0
          %v813 = vpop.f32.mrf.mxu0
          %v814 = vadd.f32 0.0, %v813
          %v815 = vpop.f32.mrf.mxu0
          %816 = vmatprep.mubr.bf16.mxu0 0
          %817 = vmatmul.mubr.bf16.gmra.mxu0 %v620
          %v818 = vpop.f32.mrf.mxu0
          %v819 = vadd.f32 0.0, %v818
          %v820 = vpop.f32.mrf.mxu0
          %v821 = vpop.f32.mrf.mxu0
          %v822 = vadd.f32 0.0, %v821
          %v823 = vpop.f32.mrf.mxu0
          %824 = vmatprep.mubr.bf16.mxu0 0
          %825 = vmatmul.mubr.bf16.gmra.mxu0 %v621
          %v826 = vpop.f32.mrf.mxu0
          %v827 = vadd.f32 0.0, %v826
          %v828 = vpop.f32.mrf.mxu0
          %v829 = vpop.f32.mrf.mxu0
          %v830 = vadd.f32 0.0, %v829
          %v831 = vpop.f32.mrf.mxu0
          %832 = vmatprep.mubr.bf16.mxu0 0
          %833 = vmatmul.mubr.bf16.gmra.mxu0 %v622
          %v834 = vpop.f32.mrf.mxu0
          %v835 = vadd.f32 0.0, %v834
          %v836 = vpop.f32.mrf.mxu0
          %v837 = vpop.f32.mrf.mxu0
          %v838 = vadd.f32 0.0, %v837
          %v839 = vpop.f32.mrf.mxu0
          %840 = vmatprep.mubr.bf16.mxu0 0
          %841 = vmatmul.mubr.bf16.gmra.mxu0 %v623
          %v842 = vpop.f32.mrf.mxu0
          %v843 = vadd.f32 0.0, %v842
          %v844 = vpop.f32.mrf.mxu0
          %v845 = vpop.f32.mrf.mxu0
          %v846 = vadd.f32 0.0, %v845
          %v847 = vpop.f32.mrf.mxu0
          %848 = vdwg.mxu0
          %v849 = vld [vmem:[%s2] sm:$0x1]
          %v851 = vlaneseq
          %v852 = vshrl.u32 %v851, 7
          %v853 = vsub.s32 0, %v852
          %v854 = vrot.slane %v849, %v853
          %v856 = vmul.f32 %v723, %v854
          %v857 = vmul.f32 %v726, %v854
          %v858 = vmul.f32 %v731, %v854
          %v859 = vmul.f32 %v734, %v854
          %v860 = vmul.f32 %v739, %v854
          %v861 = vmul.f32 %v742, %v854
          %v862 = vmul.f32 %v747, %v854
          %v863 = vmul.f32 %v750, %v854
          %v864 = vmul.f32 %v755, %v854
          %v865 = vmul.f32 %v758, %v854
          %v866 = vmul.f32 %v763, %v854
          %v867 = vmul.f32 %v766, %v854
          %v868 = vmul.f32 %v771, %v854
          %v869 = vmul.f32 %v774, %v854
          %v870 = vmul.f32 %v779, %v854
          %v871 = vmul.f32 %v782, %v854
          %v872 = vmul.f32 %v787, %v854
          %v873 = vmul.f32 %v790, %v854
          %v874 = vmul.f32 %v795, %v854
          %v875 = vmul.f32 %v798, %v854
          %v876 = vmul.f32 %v803, %v854
          %v877 = vmul.f32 %v806, %v854
          %v878 = vmul.f32 %v811, %v854
          %v879 = vmul.f32 %v814, %v854
          %v880 = vmul.f32 %v819, %v854
          %v881 = vmul.f32 %v822, %v854
          %v882 = vmul.f32 %v827, %v854
          %v883 = vmul.f32 %v830, %v854
          %v884 = vmul.f32 %v835, %v854
          %v885 = vmul.f32 %v838, %v854
          %v886 = vmul.f32 %v843, %v854
          %v887 = vmul.f32 %v846, %v854
          %v888 = vld [vmem:[%s3] sm:$0x1]
          %v890 = vlaneseq
          %v891 = vshrl.u32 %v890, 7
          %v892 = vsub.s32 0, %v891
          %v893 = vrot.slane %v888, %v892
          %v895 = vadd.f32 %v856, %v893
          %v896 = vadd.f32 %v857, %v893
          %v897 = vadd.f32 %v858, %v893
          %v898 = vadd.f32 %v859, %v893
          %v899 = vadd.f32 %v860, %v893
          %v900 = vadd.f32 %v861, %v893
          %v901 = vadd.f32 %v862, %v893
          %v902 = vadd.f32 %v863, %v893
          %v903 = vadd.f32 %v864, %v893
          %v904 = vadd.f32 %v865, %v893
          %v905 = vadd.f32 %v866, %v893
          %v906 = vadd.f32 %v867, %v893
          %v907 = vadd.f32 %v868, %v893
          %v908 = vadd.f32 %v869, %v893
          %v909 = vadd.f32 %v870, %v893
          %v910 = vadd.f32 %v871, %v893
          %v911 = vadd.f32 %v872, %v893
          %v912 = vadd.f32 %v873, %v893
          %v913 = vadd.f32 %v874, %v893
          %v914 = vadd.f32 %v875, %v893
          %v915 = vadd.f32 %v876, %v893
          %v916 = vadd.f32 %v877, %v893
          %v917 = vadd.f32 %v878, %v893
          %v918 = vadd.f32 %v879, %v893
          %v919 = vadd.f32 %v880, %v893
          %v920 = vadd.f32 %v881, %v893
          %v921 = vadd.f32 %v882, %v893
          %v922 = vadd.f32 %v883, %v893
          %v923 = vadd.f32 %v884, %v893
          %v924 = vadd.f32 %v885, %v893
          %v925 = vadd.f32 %v886, %v893
          %v926 = vadd.f32 %v887, %v893
          %v927 = vmax.f32 %v895, 0.0
          %v928 = vmax.f32 %v896, 0.0
          %v929 = vmax.f32 %v897, 0.0
          %v930 = vmax.f32 %v898, 0.0
          %v931 = vmax.f32 %v899, 0.0
          %v932 = vmax.f32 %v900, 0.0
          %v933 = vmax.f32 %v901, 0.0
          %v934 = vmax.f32 %v902, 0.0
          %v935 = vmax.f32 %v903, 0.0
          %v936 = vmax.f32 %v904, 0.0
          %v937 = vmax.f32 %v905, 0.0
          %v938 = vmax.f32 %v906, 0.0
          %v939 = vmax.f32 %v907, 0.0
          %v940 = vmax.f32 %v908, 0.0
          %v941 = vmax.f32 %v909, 0.0
          %v942 = vmax.f32 %v910, 0.0
          %v943 = vmax.f32 %v911, 0.0
          %v944 = vmax.f32 %v912, 0.0
          %v945 = vmax.f32 %v913, 0.0
          %v946 = vmax.f32 %v914, 0.0
          %v947 = vmax.f32 %v915, 0.0
          %v948 = vmax.f32 %v916, 0.0
          %v949 = vmax.f32 %v917, 0.0
          %v950 = vmax.f32 %v918, 0.0
          %v951 = vmax.f32 %v919, 0.0
          %v952 = vmax.f32 %v920, 0.0
          %v953 = vmax.f32 %v921, 0.0
          %v954 = vmax.f32 %v922, 0.0
          %v955 = vmax.f32 %v923, 0.0
          %v956 = vmax.f32 %v924, 0.0
          %v957 = vmax.f32 %v925, 0.0
          %v958 = vmax.f32 %v926, 0.0
          %v959 = vmin.f32 %v927, 6.0
          %v960 = vmin.f32 %v928, 6.0
          %v961 = vmin.f32 %v929, 6.0
          %v962 = vmin.f32 %v930, 6.0
          %v963 = vmin.f32 %v931, 6.0
          %v964 = vmin.f32 %v932, 6.0
          %v965 = vmin.f32 %v933, 6.0
          %v966 = vmin.f32 %v934, 6.0
          %v967 = vmin.f32 %v935, 6.0
          %v968 = vmin.f32 %v936, 6.0
          %v969 = vmin.f32 %v937, 6.0
          %v970 = vmin.f32 %v938, 6.0
          %v971 = vmin.f32 %v939, 6.0
          %v972 = vmin.f32 %v940, 6.0
          %v973 = vmin.f32 %v941, 6.0
          %v974 = vmin.f32 %v942, 6.0
          %v975 = vmin.f32 %v943, 6.0
          %v976 = vmin.f32 %v944, 6.0
          %v977 = vmin.f32 %v945, 6.0
          %v978 = vmin.f32 %v946, 6.0
          %v979 = vmin.f32 %v947, 6.0
          %v980 = vmin.f32 %v948, 6.0
          %v981 = vmin.f32 %v949, 6.0
          %v982 = vmin.f32 %v950, 6.0
          %v983 = vmin.f32 %v951, 6.0
          %v984 = vmin.f32 %v952, 6.0
          %v985 = vmin.f32 %v953, 6.0
          %v986 = vmin.f32 %v954, 6.0
          %v987 = vmin.f32 %v955, 6.0
          %v988 = vmin.f32 %v956, 6.0
          %v989 = vmin.f32 %v957, 6.0
          %v990 = vmin.f32 %v958, 6.0
          %s991 = scalar_lea.vmem [#allocation2], 24
          %992 = vst [vmem:[%s991 + $0x1] sm:$0xff] %v959
          %993 = vst [vmem:[%s991 + $0x9] sm:$0xff] %v960
          %994 = vst [vmem:[%s991 + $0x19] sm:$0xff] %v961
          %995 = vst [vmem:[%s991 + $0x21] sm:$0xff] %v962
          %996 = vst [vmem:[%s991 + $0x31] sm:$0xff] %v963
          %997 = vst [vmem:[%s991 + $0x39] sm:$0xff] %v964
          %998 = vst [vmem:[%s991 + $0x49] sm:$0xff] %v965
          %999 = vst [vmem:[%s991 + $0x51] sm:$0xff] %v966
          %1000 = vst [vmem:[%s991 + $0x61] sm:$0xff] %v967
          %1001 = vst [vmem:[%s991 + $0x69] sm:$0xff] %v968
          %1002 = vst [vmem:[%s991 + $0x79] sm:$0xff] %v969
          %1003 = vst [vmem:[%s991 + $0x81] sm:$0xff] %v970
          %1004 = vst [vmem:[%s991 + $0x91] sm:$0xff] %v971
          %1005 = vst [vmem:[%s991 + $0x99] sm:$0xff] %v972
          %1006 = vst [vmem:[%s991 + $0xa9] sm:$0xff] %v973
          %1007 = vst [vmem:[%s991 + $0xb1] sm:$0xff] %v974
          %1008 = vst [vmem:[%s991 + $0xc1] sm:$0xff] %v975
          %1009 = vst [vmem:[%s991 + $0xc9] sm:$0xff] %v976
          %1010 = vst [vmem:[%s991 + $0xd9] sm:$0xff] %v977
          %1011 = vst [vmem:[%s991 + $0xe1] sm:$0xff] %v978
          %1012 = vst [vmem:[%s991 + $0xf1] sm:$0xff] %v979
          %1013 = vst [vmem:[%s991 + $0xf9] sm:$0xff] %v980
          %1014 = vst [vmem:[%s991 + $0x109] sm:$0xff] %v981
          %1015 = vst [vmem:[%s991 + $0x111] sm:$0xff] %v982
          %1016 = vst [vmem:[%s991 + $0x121] sm:$0xff] %v983
          %1017 = vst [vmem:[%s991 + $0x129] sm:$0xff] %v984
          %1018 = vst [vmem:[%s991 + $0x139] sm:$0xff] %v985
          %1019 = vst [vmem:[%s991 + $0x141] sm:$0xff] %v986
          %1020 = vst [vmem:[%s991 + $0x151] sm:$0xff] %v987
          %1021 = vst [vmem:[%s991 + $0x159] sm:$0xff] %v988
          %1022 = vst [vmem:[%s991 + $0x169] sm:$0xff] %v989
          %1023 = vst [vmem:[%s991 + $0x171] sm:$0xff] %v990
        $region80: #{tpu_custom_call.1} parent=59 // pred_fallthru
          _
        %s1024 = smul.u32 %s34, 8
        %s1025 = smul.u32 %s1024, 24
        %s1026 = scalar_lea.vmem [#allocation2], %s1025
        %v1027 = vld [vmem:[%s1026] sm:$0xff]
        %v1028 = vld [vmem:[%s1026 + $0x8] sm:$0xff]
        %v1029 = vld [vmem:[%s1026 + $0x18] sm:$0xff]
        %v1030 = vld [vmem:[%s1026 + $0x20] sm:$0xff]
        %v1031 = vld [vmem:[%s1026 + $0x30] sm:$0xff]
        %v1032 = vld [vmem:[%s1026 + $0x38] sm:$0xff]
        %v1033 = vld [vmem:[%s1026 + $0x48] sm:$0xff]
        %v1034 = vld [vmem:[%s1026 + $0x50] sm:$0xff]
        %v1035 = vld [vmem:[%s1026 + $0x60] sm:$0xff]
        %v1036 = vld [vmem:[%s1026 + $0x68] sm:$0xff]
        %v1037 = vld [vmem:[%s1026 + $0x78] sm:$0xff]
        %v1038 = vld [vmem:[%s1026 + $0x80] sm:$0xff]
        %v1039 = vld [vmem:[%s1026 + $0x90] sm:$0xff]
        %v1040 = vld [vmem:[%s1026 + $0x98] sm:$0xff]
        %v1041 = vld [vmem:[%s1026 + $0xa8] sm:$0xff]
        %v1042 = vld [vmem:[%s1026 + $0xb0] sm:$0xff]
        %v1043 = vld [vmem:[#allocation8] sm:$0x1]
        %v1044 = vlaneseq
        %v1045 = vshrl.u32 %v1044, 7
        %v1046 = vsub.s32 0, %v1045
        %v1047 = vrot.slane %v1043, %v1046
        %v1048 = vmul.f32 %v1027, %v1047
        %v1049 = vmul.f32 %v1028, %v1047
        %v1050 = vmul.f32 %v1029, %v1047
        %v1051 = vmul.f32 %v1030, %v1047
        %v1052 = vmul.f32 %v1031, %v1047
        %v1053 = vmul.f32 %v1032, %v1047
        %v1054 = vmul.f32 %v1033, %v1047
        %v1055 = vmul.f32 %v1034, %v1047
        %v1056 = vmul.f32 %v1035, %v1047
        %v1057 = vmul.f32 %v1036, %v1047
        %v1058 = vmul.f32 %v1037, %v1047
        %v1059 = vmul.f32 %v1038, %v1047
        %v1060 = vmul.f32 %v1039, %v1047
        %v1061 = vmul.f32 %v1040, %v1047
        %v1062 = vmul.f32 %v1041, %v1047
        %v1063 = vmul.f32 %v1042, %v1047
        %v1064 = vadd.f32 %v1048, 0.0
        %v1065 = vadd.f32 %v1049, 0.0
        %v1066 = vadd.f32 %v1050, 0.0
        %v1067 = vadd.f32 %v1051, 0.0
        %v1068 = vadd.f32 %v1052, 0.0
        %v1069 = vadd.f32 %v1053, 0.0
        %v1070 = vadd.f32 %v1054, 0.0
        %v1071 = vadd.f32 %v1055, 0.0
        %v1072 = vadd.f32 %v1056, 0.0
        %v1073 = vadd.f32 %v1057, 0.0
        %v1074 = vadd.f32 %v1058, 0.0
        %v1075 = vadd.f32 %v1059, 0.0
        %v1076 = vadd.f32 %v1060, 0.0
        %v1077 = vadd.f32 %v1061, 0.0
        %v1078 = vadd.f32 %v1062, 0.0
        %v1079 = vadd.f32 %v1063, 0.0
        %v1080 = vld [vmem:[%s1026 + $0x1] sm:$0xff]
        %v1081 = vld [vmem:[%s1026 + $0x9] sm:$0xff]
        %v1082 = vld [vmem:[%s1026 + $0x19] sm:$0xff]
        %v1083 = vld [vmem:[%s1026 + $0x21] sm:$0xff]
        %v1084 = vld [vmem:[%s1026 + $0x31] sm:$0xff]
        %v1085 = vld [vmem:[%s1026 + $0x39] sm:$0xff]
        %v1086 = vld [vmem:[%s1026 + $0x49] sm:$0xff]
        %v1087 = vld [vmem:[%s1026 + $0x51] sm:$0xff]
        %v1088 = vld [vmem:[%s1026 + $0x61] sm:$0xff]
        %v1089 = vld [vmem:[%s1026 + $0x69] sm:$0xff]
        %v1090 = vld [vmem:[%s1026 + $0x79] sm:$0xff]
        %v1091 = vld [vmem:[%s1026 + $0x81] sm:$0xff]
        %v1092 = vld [vmem:[%s1026 + $0x91] sm:$0xff]
        %v1093 = vld [vmem:[%s1026 + $0x99] sm:$0xff]
        %v1094 = vld [vmem:[%s1026 + $0xa9] sm:$0xff]
        %v1095 = vld [vmem:[%s1026 + $0xb1] sm:$0xff]
        %v1096 = vld [vmem:[#allocation8 + $0x1] sm:$0x1]
        %v1097 = vlaneseq
        %v1098 = vshrl.u32 %v1097, 7
        %v1099 = vsub.s32 0, %v1098
        %v1100 = vrot.slane %v1096, %v1099
        %v1101 = vmul.f32 %v1080, %v1100
        %v1102 = vmul.f32 %v1081, %v1100
        %v1103 = vmul.f32 %v1082, %v1100
        %v1104 = vmul.f32 %v1083, %v1100
        %v1105 = vmul.f32 %v1084, %v1100
        %v1106 = vmul.f32 %v1085, %v1100
        %v1107 = vmul.f32 %v1086, %v1100
        %v1108 = vmul.f32 %v1087, %v1100
        %v1109 = vmul.f32 %v1088, %v1100
        %v1110 = vmul.f32 %v1089, %v1100
        %v1111 = vmul.f32 %v1090, %v1100
        %v1112 = vmul.f32 %v1091, %v1100
        %v1113 = vmul.f32 %v1092, %v1100
        %v1114 = vmul.f32 %v1093, %v1100
        %v1115 = vmul.f32 %v1094, %v1100
        %v1116 = vmul.f32 %v1095, %v1100
        %v1117 = vadd.f32 %v1064, %v1101
        %v1118 = vadd.f32 %v1065, %v1102
        %v1119 = vadd.f32 %v1066, %v1103
        %v1120 = vadd.f32 %v1067, %v1104
        %v1121 = vadd.f32 %v1068, %v1105
        %v1122 = vadd.f32 %v1069, %v1106
        %v1123 = vadd.f32 %v1070, %v1107
        %v1124 = vadd.f32 %v1071, %v1108
        %v1125 = vadd.f32 %v1072, %v1109
        %v1126 = vadd.f32 %v1073, %v1110
        %v1127 = vadd.f32 %v1074, %v1111
        %v1128 = vadd.f32 %v1075, %v1112
        %v1129 = vadd.f32 %v1076, %v1113
        %v1130 = vadd.f32 %v1077, %v1114
        %v1131 = vadd.f32 %v1078, %v1115
        %v1132 = vadd.f32 %v1079, %v1116
        %v1133 = vld [vmem:[%s1026 + $0x2] sm:$0xff]
        %v1134 = vld [vmem:[%s1026 + $0xa] sm:$0xff]
        %v1135 = vld [vmem:[%s1026 + $0x1a] sm:$0xff]
        %v1136 = vld [vmem:[%s1026 + $0x22] sm:$0xff]
        %v1137 = vld [vmem:[%s1026 + $0x32] sm:$0xff]
        %v1138 = vld [vmem:[%s1026 + $0x3a] sm:$0xff]
        %v1139 = vld [vmem:[%s1026 + $0x4a] sm:$0xff]
        %v1140 = vld [vmem:[%s1026 + $0x52] sm:$0xff]
        %v1141 = vld [vmem:[%s1026 + $0x62] sm:$0xff]
        %v1142 = vld [vmem:[%s1026 + $0x6a] sm:$0xff]
        %v1143 = vld [vmem:[%s1026 + $0x7a] sm:$0xff]
        %v1144 = vld [vmem:[%s1026 + $0x82] sm:$0xff]
        %v1145 = vld [vmem:[%s1026 + $0x92] sm:$0xff]
        %v1146 = vld [vmem:[%s1026 + $0x9a] sm:$0xff]
        %v1147 = vld [vmem:[%s1026 + $0xaa] sm:$0xff]
        %v1148 = vld [vmem:[%s1026 + $0xb2] sm:$0xff]
        %v1149 = vld [vmem:[#allocation8 + $0x2] sm:$0x1]
        %v1150 = vlaneseq
        %v1151 = vshrl.u32 %v1150, 7
        %v1152 = vsub.s32 0, %v1151
        %v1153 = vrot.slane %v1149, %v1152
        %v1154 = vmul.f32 %v1133, %v1153
        %v1155 = vmul.f32 %v1134, %v1153
        %v1156 = vmul.f32 %v1135, %v1153
        %v1157 = vmul.f32 %v1136, %v1153
        %v1158 = vmul.f32 %v1137, %v1153
        %v1159 = vmul.f32 %v1138, %v1153
        %v1160 = vmul.f32 %v1139, %v1153
        %v1161 = vmul.f32 %v1140, %v1153
        %v1162 = vmul.f32 %v1141, %v1153
        %v1163 = vmul.f32 %v1142, %v1153
        %v1164 = vmul.f32 %v1143, %v1153
        %v1165 = vmul.f32 %v1144, %v1153
        %v1166 = vmul.f32 %v1145, %v1153
        %v1167 = vmul.f32 %v1146, %v1153
        %v1168 = vmul.f32 %v1147, %v1153
        %v1169 = vmul.f32 %v1148, %v1153
        %v1170 = vadd.f32 %v1117, %v1154
        %v1171 = vadd.f32 %v1118, %v1155
        %v1172 = vadd.f32 %v1119, %v1156
        %v1173 = vadd.f32 %v1120, %v1157
        %v1174 = vadd.f32 %v1121, %v1158
        %v1175 = vadd.f32 %v1122, %v1159
        %v1176 = vadd.f32 %v1123, %v1160
        %v1177 = vadd.f32 %v1124, %v1161
        %v1178 = vadd.f32 %v1125, %v1162
        %v1179 = vadd.f32 %v1126, %v1163
        %v1180 = vadd.f32 %v1127, %v1164
        %v1181 = vadd.f32 %v1128, %v1165
        %v1182 = vadd.f32 %v1129, %v1166
        %v1183 = vadd.f32 %v1130, %v1167
        %v1184 = vadd.f32 %v1131, %v1168
        %v1185 = vadd.f32 %v1132, %v1169
        %s1186 = sadd.s32 %s1024, 1
        %s1187 = smul.u32 %s1186, 24
        %s1188 = scalar_lea.vmem [#allocation2], %s1187
        %v1189 = vld [vmem:[%s1188] sm:$0xff]
        %v1190 = vld [vmem:[%s1188 + $0x8] sm:$0xff]
        %v1191 = vld [vmem:[%s1188 + $0x18] sm:$0xff]
        %v1192 = vld [vmem:[%s1188 + $0x20] sm:$0xff]
        %v1193 = vld [vmem:[%s1188 + $0x30] sm:$0xff]
        %v1194 = vld [vmem:[%s1188 + $0x38] sm:$0xff]
        %v1195 = vld [vmem:[%s1188 + $0x48] sm:$0xff]
        %v1196 = vld [vmem:[%s1188 + $0x50] sm:$0xff]
        %v1197 = vld [vmem:[%s1188 + $0x60] sm:$0xff]
        %v1198 = vld [vmem:[%s1188 + $0x68] sm:$0xff]
        %v1199 = vld [vmem:[%s1188 + $0x78] sm:$0xff]
        %v1200 = vld [vmem:[%s1188 + $0x80] sm:$0xff]
        %v1201 = vld [vmem:[%s1188 + $0x90] sm:$0xff]
        %v1202 = vld [vmem:[%s1188 + $0x98] sm:$0xff]
        %v1203 = vld [vmem:[%s1188 + $0xa8] sm:$0xff]
        %v1204 = vld [vmem:[%s1188 + $0xb0] sm:$0xff]
        %v1205 = vld [vmem:[#allocation8 + $0x3] sm:$0x1]
        %v1206 = vlaneseq
        %v1207 = vshrl.u32 %v1206, 7
        %v1208 = vsub.s32 0, %v1207
        %v1209 = vrot.slane %v1205, %v1208
        %v1210 = vmul.f32 %v1189, %v1209
        %v1211 = vmul.f32 %v1190, %v1209
        %v1212 = vmul.f32 %v1191, %v1209
        %v1213 = vmul.f32 %v1192, %v1209
        %v1214 = vmul.f32 %v1193, %v1209
        %v1215 = vmul.f32 %v1194, %v1209
        %v1216 = vmul.f32 %v1195, %v1209
        %v1217 = vmul.f32 %v1196, %v1209
        %v1218 = vmul.f32 %v1197, %v1209
        %v1219 = vmul.f32 %v1198, %v1209
        %v1220 = vmul.f32 %v1199, %v1209
        %v1221 = vmul.f32 %v1200, %v1209
        %v1222 = vmul.f32 %v1201, %v1209
        %v1223 = vmul.f32 %v1202, %v1209
        %v1224 = vmul.f32 %v1203, %v1209
        %v1225 = vmul.f32 %v1204, %v1209
        %v1226 = vadd.f32 %v1170, %v1210
        %v1227 = vadd.f32 %v1171, %v1211
        %v1228 = vadd.f32 %v1172, %v1212
        %v1229 = vadd.f32 %v1173, %v1213
        %v1230 = vadd.f32 %v1174, %v1214
        %v1231 = vadd.f32 %v1175, %v1215
        %v1232 = vadd.f32 %v1176, %v1216
        %v1233 = vadd.f32 %v1177, %v1217
        %v1234 = vadd.f32 %v1178, %v1218
        %v1235 = vadd.f32 %v1179, %v1219
        %v1236 = vadd.f32 %v1180, %v1220
        %v1237 = vadd.f32 %v1181, %v1221
        %v1238 = vadd.f32 %v1182, %v1222
        %v1239 = vadd.f32 %v1183, %v1223
        %v1240 = vadd.f32 %v1184, %v1224
        %v1241 = vadd.f32 %v1185, %v1225
        %v1242 = vld [vmem:[%s1188 + $0x1] sm:$0xff]
        %v1243 = vld [vmem:[%s1188 + $0x9] sm:$0xff]
        %v1244 = vld [vmem:[%s1188 + $0x19] sm:$0xff]
        %v1245 = vld [vmem:[%s1188 + $0x21] sm:$0xff]
        %v1246 = vld [vmem:[%s1188 + $0x31] sm:$0xff]
        %v1247 = vld [vmem:[%s1188 + $0x39] sm:$0xff]
        %v1248 = vld [vmem:[%s1188 + $0x49] sm:$0xff]
        %v1249 = vld [vmem:[%s1188 + $0x51] sm:$0xff]
        %v1250 = vld [vmem:[%s1188 + $0x61] sm:$0xff]
        %v1251 = vld [vmem:[%s1188 + $0x69] sm:$0xff]
        %v1252 = vld [vmem:[%s1188 + $0x79] sm:$0xff]
        %v1253 = vld [vmem:[%s1188 + $0x81] sm:$0xff]
        %v1254 = vld [vmem:[%s1188 + $0x91] sm:$0xff]
        %v1255 = vld [vmem:[%s1188 + $0x99] sm:$0xff]
        %v1256 = vld [vmem:[%s1188 + $0xa9] sm:$0xff]
        %v1257 = vld [vmem:[%s1188 + $0xb1] sm:$0xff]
        %v1258 = vld [vmem:[#allocation8 + $0x4] sm:$0x1]
        %v1259 = vlaneseq
        %v1260 = vshrl.u32 %v1259, 7
        %v1261 = vsub.s32 0, %v1260
        %v1262 = vrot.slane %v1258, %v1261
        %v1263 = vmul.f32 %v1242, %v1262
        %v1264 = vmul.f32 %v1243, %v1262
        %v1265 = vmul.f32 %v1244, %v1262
        %v1266 = vmul.f32 %v1245, %v1262
        %v1267 = vmul.f32 %v1246, %v1262
        %v1268 = vmul.f32 %v1247, %v1262
        %v1269 = vmul.f32 %v1248, %v1262
        %v1270 = vmul.f32 %v1249, %v1262
        %v1271 = vmul.f32 %v1250, %v1262
        %v1272 = vmul.f32 %v1251, %v1262
        %v1273 = vmul.f32 %v1252, %v1262
        %v1274 = vmul.f32 %v1253, %v1262
        %v1275 = vmul.f32 %v1254, %v1262
        %v1276 = vmul.f32 %v1255, %v1262
        %v1277 = vmul.f32 %v1256, %v1262
        %v1278 = vmul.f32 %v1257, %v1262
        %v1279 = vadd.f32 %v1226, %v1263
        %v1280 = vadd.f32 %v1227, %v1264
        %v1281 = vadd.f32 %v1228, %v1265
        %v1282 = vadd.f32 %v1229, %v1266
        %v1283 = vadd.f32 %v1230, %v1267
        %v1284 = vadd.f32 %v1231, %v1268
        %v1285 = vadd.f32 %v1232, %v1269
        %v1286 = vadd.f32 %v1233, %v1270
        %v1287 = vadd.f32 %v1234, %v1271
        %v1288 = vadd.f32 %v1235, %v1272
        %v1289 = vadd.f32 %v1236, %v1273
        %v1290 = vadd.f32 %v1237, %v1274
        %v1291 = vadd.f32 %v1238, %v1275
        %v1292 = vadd.f32 %v1239, %v1276
        %v1293 = vadd.f32 %v1240, %v1277
        %v1294 = vadd.f32 %v1241, %v1278
        %v1295 = vld [vmem:[%s1188 + $0x2] sm:$0xff]
        %v1296 = vld [vmem:[%s1188 + $0xa] sm:$0xff]
        %v1297 = vld [vmem:[%s1188 + $0x1a] sm:$0xff]
        %v1298 = vld [vmem:[%s1188 + $0x22] sm:$0xff]
        %v1299 = vld [vmem:[%s1188 + $0x32] sm:$0xff]
        %v1300 = vld [vmem:[%s1188 + $0x3a] sm:$0xff]
        %v1301 = vld [vmem:[%s1188 + $0x4a] sm:$0xff]
        %v1302 = vld [vmem:[%s1188 + $0x52] sm:$0xff]
        %v1303 = vld [vmem:[%s1188 + $0x62] sm:$0xff]
        %v1304 = vld [vmem:[%s1188 + $0x6a] sm:$0xff]
        %v1305 = vld [vmem:[%s1188 + $0x7a] sm:$0xff]
        %v1306 = vld [vmem:[%s1188 + $0x82] sm:$0xff]
        %v1307 = vld [vmem:[%s1188 + $0x92] sm:$0xff]
        %v1308 = vld [vmem:[%s1188 + $0x9a] sm:$0xff]
        %v1309 = vld [vmem:[%s1188 + $0xaa] sm:$0xff]
        %v1310 = vld [vmem:[%s1188 + $0xb2] sm:$0xff]
        %v1311 = vld [vmem:[#allocation8 + $0x5] sm:$0x1]
        %v1312 = vlaneseq
        %v1313 = vshrl.u32 %v1312, 7
        %v1314 = vsub.s32 0, %v1313
        %v1315 = vrot.slane %v1311, %v1314
        %v1316 = vmul.f32 %v1295, %v1315
        %v1317 = vmul.f32 %v1296, %v1315
        %v1318 = vmul.f32 %v1297, %v1315
        %v1319 = vmul.f32 %v1298, %v1315
        %v1320 = vmul.f32 %v1299, %v1315
        %v1321 = vmul.f32 %v1300, %v1315
        %v1322 = vmul.f32 %v1301, %v1315
        %v1323 = vmul.f32 %v1302, %v1315
        %v1324 = vmul.f32 %v1303, %v1315
        %v1325 = vmul.f32 %v1304, %v1315
        %v1326 = vmul.f32 %v1305, %v1315
        %v1327 = vmul.f32 %v1306, %v1315
        %v1328 = vmul.f32 %v1307, %v1315
        %v1329 = vmul.f32 %v1308, %v1315
        %v1330 = vmul.f32 %v1309, %v1315
        %v1331 = vmul.f32 %v1310, %v1315
        %v1332 = vadd.f32 %v1279, %v1316
        %v1333 = vadd.f32 %v1280, %v1317
        %v1334 = vadd.f32 %v1281, %v1318
        %v1335 = vadd.f32 %v1282, %v1319
        %v1336 = vadd.f32 %v1283, %v1320
        %v1337 = vadd.f32 %v1284, %v1321
        %v1338 = vadd.f32 %v1285, %v1322
        %v1339 = vadd.f32 %v1286, %v1323
        %v1340 = vadd.f32 %v1287, %v1324
        %v1341 = vadd.f32 %v1288, %v1325
        %v1342 = vadd.f32 %v1289, %v1326
        %v1343 = vadd.f32 %v1290, %v1327
        %v1344 = vadd.f32 %v1291, %v1328
        %v1345 = vadd.f32 %v1292, %v1329
        %v1346 = vadd.f32 %v1293, %v1330
        %v1347 = vadd.f32 %v1294, %v1331
        %s1348 = sadd.s32 %s1024, 2
        %s1349 = smul.u32 %s1348, 24
        %s1350 = scalar_lea.vmem [#allocation2], %s1349
        %v1351 = vld [vmem:[%s1350] sm:$0xff]
        %v1352 = vld [vmem:[%s1350 + $0x8] sm:$0xff]
        %v1353 = vld [vmem:[%s1350 + $0x18] sm:$0xff]
        %v1354 = vld [vmem:[%s1350 + $0x20] sm:$0xff]
        %v1355 = vld [vmem:[%s1350 + $0x30] sm:$0xff]
        %v1356 = vld [vmem:[%s1350 + $0x38] sm:$0xff]
        %v1357 = vld [vmem:[%s1350 + $0x48] sm:$0xff]
        %v1358 = vld [vmem:[%s1350 + $0x50] sm:$0xff]
        %v1359 = vld [vmem:[%s1350 + $0x60] sm:$0xff]
        %v1360 = vld [vmem:[%s1350 + $0x68] sm:$0xff]
        %v1361 = vld [vmem:[%s1350 + $0x78] sm:$0xff]
        %v1362 = vld [vmem:[%s1350 + $0x80] sm:$0xff]
        %v1363 = vld [vmem:[%s1350 + $0x90] sm:$0xff]
        %v1364 = vld [vmem:[%s1350 + $0x98] sm:$0xff]
        %v1365 = vld [vmem:[%s1350 + $0xa8] sm:$0xff]
        %v1366 = vld [vmem:[%s1350 + $0xb0] sm:$0xff]
        %v1367 = vld [vmem:[#allocation8 + $0x6] sm:$0x1]
        %v1368 = vlaneseq
        %v1369 = vshrl.u32 %v1368, 7
        %v1370 = vsub.s32 0, %v1369
        %v1371 = vrot.slane %v1367, %v1370
        %v1372 = vmul.f32 %v1351, %v1371
        %v1373 = vmul.f32 %v1352, %v1371
        %v1374 = vmul.f32 %v1353, %v1371
        %v1375 = vmul.f32 %v1354, %v1371
        %v1376 = vmul.f32 %v1355, %v1371
        %v1377 = vmul.f32 %v1356, %v1371
        %v1378 = vmul.f32 %v1357, %v1371
        %v1379 = vmul.f32 %v1358, %v1371
        %v1380 = vmul.f32 %v1359, %v1371
        %v1381 = vmul.f32 %v1360, %v1371
        %v1382 = vmul.f32 %v1361, %v1371
        %v1383 = vmul.f32 %v1362, %v1371
        %v1384 = vmul.f32 %v1363, %v1371
        %v1385 = vmul.f32 %v1364, %v1371
        %v1386 = vmul.f32 %v1365, %v1371
        %v1387 = vmul.f32 %v1366, %v1371
        %v1388 = vadd.f32 %v1332, %v1372
        %v1389 = vadd.f32 %v1333, %v1373
        %v1390 = vadd.f32 %v1334, %v1374
        %v1391 = vadd.f32 %v1335, %v1375
        %v1392 = vadd.f32 %v1336, %v1376
        %v1393 = vadd.f32 %v1337, %v1377
        %v1394 = vadd.f32 %v1338, %v1378
        %v1395 = vadd.f32 %v1339, %v1379
        %v1396 = vadd.f32 %v1340, %v1380
        %v1397 = vadd.f32 %v1341, %v1381
        %v1398 = vadd.f32 %v1342, %v1382
        %v1399 = vadd.f32 %v1343, %v1383
        %v1400 = vadd.f32 %v1344, %v1384
        %v1401 = vadd.f32 %v1345, %v1385
        %v1402 = vadd.f32 %v1346, %v1386
        %v1403 = vadd.f32 %v1347, %v1387
        %v1404 = vld [vmem:[%s1350 + $0x1] sm:$0xff]
        %v1405 = vld [vmem:[%s1350 + $0x9] sm:$0xff]
        %v1406 = vld [vmem:[%s1350 + $0x19] sm:$0xff]
        %v1407 = vld [vmem:[%s1350 + $0x21] sm:$0xff]
        %v1408 = vld [vmem:[%s1350 + $0x31] sm:$0xff]
        %v1409 = vld [vmem:[%s1350 + $0x39] sm:$0xff]
        %v1410 = vld [vmem:[%s1350 + $0x49] sm:$0xff]
        %v1411 = vld [vmem:[%s1350 + $0x51] sm:$0xff]
        %v1412 = vld [vmem:[%s1350 + $0x61] sm:$0xff]
        %v1413 = vld [vmem:[%s1350 + $0x69] sm:$0xff]
        %v1414 = vld [vmem:[%s1350 + $0x79] sm:$0xff]
        %v1415 = vld [vmem:[%s1350 + $0x81] sm:$0xff]
        %v1416 = vld [vmem:[%s1350 + $0x91] sm:$0xff]
        %v1417 = vld [vmem:[%s1350 + $0x99] sm:$0xff]
        %v1418 = vld [vmem:[%s1350 + $0xa9] sm:$0xff]
        %v1419 = vld [vmem:[%s1350 + $0xb1] sm:$0xff]
        %v1420 = vld [vmem:[#allocation8 + $0x7] sm:$0x1]
        %v1421 = vlaneseq
        %v1422 = vshrl.u32 %v1421, 7
        %v1423 = vsub.s32 0, %v1422
        %v1424 = vrot.slane %v1420, %v1423
        %v1425 = vmul.f32 %v1404, %v1424
        %v1426 = vmul.f32 %v1405, %v1424
        %v1427 = vmul.f32 %v1406, %v1424
        %v1428 = vmul.f32 %v1407, %v1424
        %v1429 = vmul.f32 %v1408, %v1424
        %v1430 = vmul.f32 %v1409, %v1424
        %v1431 = vmul.f32 %v1410, %v1424
        %v1432 = vmul.f32 %v1411, %v1424
        %v1433 = vmul.f32 %v1412, %v1424
        %v1434 = vmul.f32 %v1413, %v1424
        %v1435 = vmul.f32 %v1414, %v1424
        %v1436 = vmul.f32 %v1415, %v1424
        %v1437 = vmul.f32 %v1416, %v1424
        %v1438 = vmul.f32 %v1417, %v1424
        %v1439 = vmul.f32 %v1418, %v1424
        %v1440 = vmul.f32 %v1419, %v1424
        %v1441 = vadd.f32 %v1388, %v1425
        %v1442 = vadd.f32 %v1389, %v1426
        %v1443 = vadd.f32 %v1390, %v1427
        %v1444 = vadd.f32 %v1391, %v1428
        %v1445 = vadd.f32 %v1392, %v1429
        %v1446 = vadd.f32 %v1393, %v1430
        %v1447 = vadd.f32 %v1394, %v1431
        %v1448 = vadd.f32 %v1395, %v1432
        %v1449 = vadd.f32 %v1396, %v1433
        %v1450 = vadd.f32 %v1397, %v1434
        %v1451 = vadd.f32 %v1398, %v1435
        %v1452 = vadd.f32 %v1399, %v1436
        %v1453 = vadd.f32 %v1400, %v1437
        %v1454 = vadd.f32 %v1401, %v1438
        %v1455 = vadd.f32 %v1402, %v1439
        %v1456 = vadd.f32 %v1403, %v1440
        %v1457 = vld [vmem:[%s1350 + $0x2] sm:$0xff]
        %v1458 = vld [vmem:[%s1350 + $0xa] sm:$0xff]
        %v1459 = vld [vmem:[%s1350 + $0x1a] sm:$0xff]
        %v1460 = vld [vmem:[%s1350 + $0x22] sm:$0xff]
        %v1461 = vld [vmem:[%s1350 + $0x32] sm:$0xff]
        %v1462 = vld [vmem:[%s1350 + $0x3a] sm:$0xff]
        %v1463 = vld [vmem:[%s1350 + $0x4a] sm:$0xff]
        %v1464 = vld [vmem:[%s1350 + $0x52] sm:$0xff]
        %v1465 = vld [vmem:[%s1350 + $0x62] sm:$0xff]
        %v1466 = vld [vmem:[%s1350 + $0x6a] sm:$0xff]
        %v1467 = vld [vmem:[%s1350 + $0x7a] sm:$0xff]
        %v1468 = vld [vmem:[%s1350 + $0x82] sm:$0xff]
        %v1469 = vld [vmem:[%s1350 + $0x92] sm:$0xff]
        %v1470 = vld [vmem:[%s1350 + $0x9a] sm:$0xff]
        %v1471 = vld [vmem:[%s1350 + $0xaa] sm:$0xff]
        %v1472 = vld [vmem:[%s1350 + $0xb2] sm:$0xff]
        %v1473 = vld [vmem:[#allocation8 + $0x8] sm:$0x1]
        %v1474 = vlaneseq
        %v1475 = vshrl.u32 %v1474, 7
        %v1476 = vsub.s32 0, %v1475
        %v1477 = vrot.slane %v1473, %v1476
        %v1478 = vmul.f32 %v1457, %v1477
        %v1479 = vmul.f32 %v1458, %v1477
        %v1480 = vmul.f32 %v1459, %v1477
        %v1481 = vmul.f32 %v1460, %v1477
        %v1482 = vmul.f32 %v1461, %v1477
        %v1483 = vmul.f32 %v1462, %v1477
        %v1484 = vmul.f32 %v1463, %v1477
        %v1485 = vmul.f32 %v1464, %v1477
        %v1486 = vmul.f32 %v1465, %v1477
        %v1487 = vmul.f32 %v1466, %v1477
        %v1488 = vmul.f32 %v1467, %v1477
        %v1489 = vmul.f32 %v1468, %v1477
        %v1490 = vmul.f32 %v1469, %v1477
        %v1491 = vmul.f32 %v1470, %v1477
        %v1492 = vmul.f32 %v1471, %v1477
        %v1493 = vmul.f32 %v1472, %v1477
        %v1494 = vadd.f32 %v1441, %v1478
        %v1495 = vadd.f32 %v1442, %v1479
        %v1496 = vadd.f32 %v1443, %v1480
        %v1497 = vadd.f32 %v1444, %v1481
        %v1498 = vadd.f32 %v1445, %v1482
        %v1499 = vadd.f32 %v1446, %v1483
        %v1500 = vadd.f32 %v1447, %v1484
        %v1501 = vadd.f32 %v1448, %v1485
        %v1502 = vadd.f32 %v1449, %v1486
        %v1503 = vadd.f32 %v1450, %v1487
        %v1504 = vadd.f32 %v1451, %v1488
        %v1505 = vadd.f32 %v1452, %v1489
        %v1506 = vadd.f32 %v1453, %v1490
        %v1507 = vadd.f32 %v1454, %v1491
        %v1508 = vadd.f32 %v1455, %v1492
        %v1509 = vadd.f32 %v1456, %v1493
        %v1510 = vld [vmem:[%s5] sm:$0x1]
        %v1512 = vlaneseq
        %v1513 = vshrl.u32 %v1512, 7
        %v1514 = vsub.s32 0, %v1513
        %v1515 = vrot.slane %v1510, %v1514
        %v1517 = vmul.f32 %v1494, %v1515
        %v1518 = vmul.f32 %v1495, %v1515
        %v1519 = vmul.f32 %v1496, %v1515
        %v1520 = vmul.f32 %v1497, %v1515
        %v1521 = vmul.f32 %v1498, %v1515
        %v1522 = vmul.f32 %v1499, %v1515
        %v1523 = vmul.f32 %v1500, %v1515
        %v1524 = vmul.f32 %v1501, %v1515
        %v1525 = vmul.f32 %v1502, %v1515
        %v1526 = vmul.f32 %v1503, %v1515
        %v1527 = vmul.f32 %v1504, %v1515
        %v1528 = vmul.f32 %v1505, %v1515
        %v1529 = vmul.f32 %v1506, %v1515
        %v1530 = vmul.f32 %v1507, %v1515
        %v1531 = vmul.f32 %v1508, %v1515
        %v1532 = vmul.f32 %v1509, %v1515
        %v1533 = vld [vmem:[%s6] sm:$0x1]
        %v1535 = vlaneseq
        %v1536 = vshrl.u32 %v1535, 7
        %v1537 = vsub.s32 0, %v1536
        %v1538 = vrot.slane %v1533, %v1537
        %v1540 = vadd.f32 %v1517, %v1538
        %v1541 = vadd.f32 %v1518, %v1538
        %v1542 = vadd.f32 %v1519, %v1538
        %v1543 = vadd.f32 %v1520, %v1538
        %v1544 = vadd.f32 %v1521, %v1538
        %v1545 = vadd.f32 %v1522, %v1538
        %v1546 = vadd.f32 %v1523, %v1538
        %v1547 = vadd.f32 %v1524, %v1538
        %v1548 = vadd.f32 %v1525, %v1538
        %v1549 = vadd.f32 %v1526, %v1538
        %v1550 = vadd.f32 %v1527, %v1538
        %v1551 = vadd.f32 %v1528, %v1538
        %v1552 = vadd.f32 %v1529, %v1538
        %v1553 = vadd.f32 %v1530, %v1538
        %v1554 = vadd.f32 %v1531, %v1538
        %v1555 = vadd.f32 %v1532, %v1538
        %v1556 = vmax.f32 %v1540, 0.0
        %v1557 = vmax.f32 %v1541, 0.0
        %v1558 = vmax.f32 %v1542, 0.0
        %v1559 = vmax.f32 %v1543, 0.0
        %v1560 = vmax.f32 %v1544, 0.0
        %v1561 = vmax.f32 %v1545, 0.0
        %v1562 = vmax.f32 %v1546, 0.0
        %v1563 = vmax.f32 %v1547, 0.0
        %v1564 = vmax.f32 %v1548, 0.0
        %v1565 = vmax.f32 %v1549, 0.0
        %v1566 = vmax.f32 %v1550, 0.0
        %v1567 = vmax.f32 %v1551, 0.0
        %v1568 = vmax.f32 %v1552, 0.0
        %v1569 = vmax.f32 %v1553, 0.0
        %v1570 = vmax.f32 %v1554, 0.0
        %v1571 = vmax.f32 %v1555, 0.0
        %v1572 = vmin.f32 %v1556, 6.0
        %v1573 = vmin.f32 %v1557, 6.0
        %v1574 = vmin.f32 %v1558, 6.0
        %v1575 = vmin.f32 %v1559, 6.0
        %v1576 = vmin.f32 %v1560, 6.0
        %v1577 = vmin.f32 %v1561, 6.0
        %v1578 = vmin.f32 %v1562, 6.0
        %v1579 = vmin.f32 %v1563, 6.0
        %v1580 = vmin.f32 %v1564, 6.0
        %v1581 = vmin.f32 %v1565, 6.0
        %v1582 = vmin.f32 %v1566, 6.0
        %v1583 = vmin.f32 %v1567, 6.0
        %v1584 = vmin.f32 %v1568, 6.0
        %v1585 = vmin.f32 %v1569, 6.0
        %v1586 = vmin.f32 %v1570, 6.0
        %v1587 = vmin.f32 %v1571, 6.0
        %v1588 = vpack.c.bf16 %v1573, %v1572
        %v1589 = vpack.c.bf16 %v1575, %v1574
        %v1590 = vpack.c.bf16 %v1577, %v1576
        %v1591 = vpack.c.bf16 %v1579, %v1578
        %v1592 = vpack.c.bf16 %v1581, %v1580
        %v1593 = vpack.c.bf16 %v1583, %v1582
        %v1594 = vpack.c.bf16 %v1585, %v1584
        %v1595 = vpack.c.bf16 %v1587, %v1586
        %v1596 = vld [vmem:[#allocation9] sm:$0xf]
        %v1597 = vld [vmem:[#allocation9 + $0x4] sm:$0xf]
        %v1598 = vld [vmem:[#allocation9 + $0x8] sm:$0xf]
        %v1599 = vld [vmem:[#allocation9 + $0xc] sm:$0xf]
        %v1600 = vld [vmem:[#allocation9 + $0x10] sm:$0xf]
        %v1601 = vld [vmem:[#allocation9 + $0x14] sm:$0xf]
        %v1602 = vld [vmem:[#allocation9 + $0x18] sm:$0xf]
        %v1603 = vld [vmem:[#allocation9 + $0x1c] sm:$0xf]
        %v1604 = vld [vmem:[#allocation9 + $0x20] sm:$0xf]
        %v1605 = vld [vmem:[#allocation9 + $0x24] sm:$0xf]
        %v1606 = vld [vmem:[#allocation9 + $0x28] sm:$0xf]
        %v1607 = vld [vmem:[#allocation9 + $0x2c] sm:$0xf]
        %v1608 = vld [vmem:[#allocation9 + $0x30] sm:$0xf]
        %v1609 = vld [vmem:[#allocation9 + $0x34] sm:$0xf]
        %v1610 = vld [vmem:[#allocation9 + $0x38] sm:$0xf]
        %v1611 = vld [vmem:[#allocation9 + $0x3c] sm:$0xf]
        %v1628 = vunpack.c.l.b16 %v1596
        %v1629 = vunpack.c.l.b16 %v1597
        %v1630 = vunpack.c.l.b16 %v1598
        %v1631 = vunpack.c.l.b16 %v1599
        %v1632 = vunpack.c.l.b16 %v1600
        %v1633 = vunpack.c.l.b16 %v1601
        %v1634 = vunpack.c.l.b16 %v1602
        %v1635 = vunpack.c.l.b16 %v1603
        %v1636 = vunpack.c.l.b16 %v1604
        %v1637 = vunpack.c.l.b16 %v1605
        %v1638 = vunpack.c.l.b16 %v1606
        %v1639 = vunpack.c.l.b16 %v1607
        %v1640 = vunpack.c.l.b16 %v1608
        %v1641 = vunpack.c.l.b16 %v1609
        %v1642 = vunpack.c.l.b16 %v1610
        %v1643 = vunpack.c.l.b16 %v1611
        %v1644 = vpack.c.b16 %v1629, %v1628
        %v1645 = vpack.c.b16 %v1631, %v1630
        %v1646 = vpack.c.b16 %v1633, %v1632
        %v1647 = vpack.c.b16 %v1635, %v1634
        %v1648 = vpack.c.b16 %v1637, %v1636
        %v1649 = vpack.c.b16 %v1639, %v1638
        %v1650 = vpack.c.b16 %v1641, %v1640
        %v1651 = vpack.c.b16 %v1643, %v1642
        %1660 = vmatprep.subr.bf16.mxu0 0
        %1661 = vmatpush1.bf16.msra.mxu0 %v1651
        %1662 = vmatprep.subr.bf16.mxu0 0
        %1663 = vmatpush1.bf16.msra.mxu0 %v1650
        %1664 = vmatprep.subr.bf16.mxu0 0
        %1665 = vmatpush1.bf16.msra.mxu0 %v1649
        %1666 = vmatprep.subr.bf16.mxu0 0
        %1667 = vmatpush1.bf16.msra.mxu0 %v1648
        %1668 = vmatprep.subr.bf16.mxu0 0
        %1669 = vmatpush1.bf16.msra.mxu0 %v1647
        %1670 = vmatprep.subr.bf16.mxu0 0
        %1671 = vmatpush1.bf16.msra.mxu0 %v1646
        %1672 = vmatprep.subr.bf16.mxu0 0
        %1673 = vmatpush1.bf16.msra.mxu0 %v1645
        %1674 = vmatprep.subr.bf16.mxu0 0
        %1675 = vmatpush1.bf16.msra.mxu0 %v1644
        %1676 = vmatprep.subr.bf16.mxu0 0
        %1677 = vmatpush2.bf16.msra.mxu0 0
        %1678 = vmatprep.subr.bf16.mxu0 0
        %1679 = vmatpush2.bf16.msra.mxu0 0
        %1680 = vmatprep.subr.bf16.mxu0 0
        %1681 = vmatpush2.bf16.msra.mxu0 0
        %1682 = vmatprep.subr.bf16.mxu0 0
        %1683 = vmatpush2.bf16.msra.mxu0 0
        %1684 = vmatprep.subr.bf16.mxu0 0
        %1685 = vmatpush2.bf16.msra.mxu0 0
        %1686 = vmatprep.subr.bf16.mxu0 0
        %1687 = vmatpush2.bf16.msra.mxu0 0
        %1688 = vmatprep.subr.bf16.mxu0 0
        %1689 = vmatpush2.bf16.msra.mxu0 0
        %1690 = vmatprep.subr.bf16.mxu0 0
        %1691 = vmatpush2.bf16.msra.mxu0 0
        %1692 = vmatprep.mubr.bf16.mxu0 0
        %1693 = vmatmul.mubr.bf16.gmra.mxu0 %v1588
        %v1694 = vpop.f32.mrf.mxu0
        %v1695 = vadd.f32 0.0, %v1694
        %v1696 = vpop.f32.mrf.mxu0
        %v1697 = vpop.f32.mrf.mxu0
        %v1698 = vadd.f32 0.0, %v1697
        %v1699 = vpop.f32.mrf.mxu0
        %1700 = vmatprep.mubr.bf16.mxu0 0
        %1701 = vmatmul.mubr.bf16.gmra.mxu0 %v1589
        %v1702 = vpop.f32.mrf.mxu0
        %v1703 = vadd.f32 0.0, %v1702
        %v1704 = vpop.f32.mrf.mxu0
        %v1705 = vpop.f32.mrf.mxu0
        %v1706 = vadd.f32 0.0, %v1705
        %v1707 = vpop.f32.mrf.mxu0
        %1708 = vmatprep.mubr.bf16.mxu0 0
        %1709 = vmatmul.mubr.bf16.gmra.mxu0 %v1590
        %v1710 = vpop.f32.mrf.mxu0
        %v1711 = vadd.f32 0.0, %v1710
        %v1712 = vpop.f32.mrf.mxu0
        %v1713 = vpop.f32.mrf.mxu0
        %v1714 = vadd.f32 0.0, %v1713
        %v1715 = vpop.f32.mrf.mxu0
        %1716 = vmatprep.mubr.bf16.mxu0 0
        %1717 = vmatmul.mubr.bf16.gmra.mxu0 %v1591
        %v1718 = vpop.f32.mrf.mxu0
        %v1719 = vadd.f32 0.0, %v1718
        %v1720 = vpop.f32.mrf.mxu0
        %v1721 = vpop.f32.mrf.mxu0
        %v1722 = vadd.f32 0.0, %v1721
        %v1723 = vpop.f32.mrf.mxu0
        %1724 = vmatprep.mubr.bf16.mxu0 0
        %1725 = vmatmul.mubr.bf16.gmra.mxu0 %v1592
        %v1726 = vpop.f32.mrf.mxu0
        %v1727 = vadd.f32 0.0, %v1726
        %v1728 = vpop.f32.mrf.mxu0
        %v1729 = vpop.f32.mrf.mxu0
        %v1730 = vadd.f32 0.0, %v1729
        %v1731 = vpop.f32.mrf.mxu0
        %1732 = vmatprep.mubr.bf16.mxu0 0
        %1733 = vmatmul.mubr.bf16.gmra.mxu0 %v1593
        %v1734 = vpop.f32.mrf.mxu0
        %v1735 = vadd.f32 0.0, %v1734
        %v1736 = vpop.f32.mrf.mxu0
        %v1737 = vpop.f32.mrf.mxu0
        %v1738 = vadd.f32 0.0, %v1737
        %v1739 = vpop.f32.mrf.mxu0
        %1740 = vmatprep.mubr.bf16.mxu0 0
        %1741 = vmatmul.mubr.bf16.gmra.mxu0 %v1594
        %v1742 = vpop.f32.mrf.mxu0
        %v1743 = vadd.f32 0.0, %v1742
        %v1744 = vpop.f32.mrf.mxu0
        %v1745 = vpop.f32.mrf.mxu0
        %v1746 = vadd.f32 0.0, %v1745
        %v1747 = vpop.f32.mrf.mxu0
        %1748 = vmatprep.mubr.bf16.mxu0 0
        %1749 = vmatmul.mubr.bf16.gmra.mxu0 %v1595
        %v1750 = vpop.f32.mrf.mxu0
        %v1751 = vadd.f32 0.0, %v1750
        %v1752 = vpop.f32.mrf.mxu0
        %v1753 = vpop.f32.mrf.mxu0
        %v1754 = vadd.f32 0.0, %v1753
        %v1755 = vpop.f32.mrf.mxu0
        %1756 = vdwg.mxu0
        %v1757 = vld [vmem:[%s8] sm:$0x1]
        %v1759 = vlaneseq
        %v1760 = vshrl.u32 %v1759, 7
        %v1761 = vsub.s32 0, %v1760
        %v1762 = vrot.slane %v1757, %v1761
        %v1764 = vmul.f32 %v1695, %v1762
        %v1765 = vmul.f32 %v1698, %v1762
        %v1766 = vmul.f32 %v1703, %v1762
        %v1767 = vmul.f32 %v1706, %v1762
        %v1768 = vmul.f32 %v1711, %v1762
        %v1769 = vmul.f32 %v1714, %v1762
        %v1770 = vmul.f32 %v1719, %v1762
        %v1771 = vmul.f32 %v1722, %v1762
        %v1772 = vmul.f32 %v1727, %v1762
        %v1773 = vmul.f32 %v1730, %v1762
        %v1774 = vmul.f32 %v1735, %v1762
        %v1775 = vmul.f32 %v1738, %v1762
        %v1776 = vmul.f32 %v1743, %v1762
        %v1777 = vmul.f32 %v1746, %v1762
        %v1778 = vmul.f32 %v1751, %v1762
        %v1779 = vmul.f32 %v1754, %v1762
        %v1780 = vld [vmem:[%s9] sm:$0x1]
        %v1782 = vlaneseq
        %v1783 = vshrl.u32 %v1782, 7
        %v1784 = vsub.s32 0, %v1783
        %v1785 = vrot.slane %v1780, %v1784
        %v1787 = vadd.f32 %v1764, %v1785
        %v1788 = vadd.f32 %v1765, %v1785
        %v1789 = vadd.f32 %v1766, %v1785
        %v1790 = vadd.f32 %v1767, %v1785
        %v1791 = vadd.f32 %v1768, %v1785
        %v1792 = vadd.f32 %v1769, %v1785
        %v1793 = vadd.f32 %v1770, %v1785
        %v1794 = vadd.f32 %v1771, %v1785
        %v1795 = vadd.f32 %v1772, %v1785
        %v1796 = vadd.f32 %v1773, %v1785
        %v1797 = vadd.f32 %v1774, %v1785
        %v1798 = vadd.f32 %v1775, %v1785
        %v1799 = vadd.f32 %v1776, %v1785
        %v1800 = vadd.f32 %v1777, %v1785
        %v1801 = vadd.f32 %v1778, %v1785
        %v1802 = vadd.f32 %v1779, %v1785
        %s1803 = smul.u32 %s1024, 2
        %s1804 = smul.addr %s1803, 4
        %s1805 = scalar_lea.vmem %s387, %s1804 [#allocation3]
        %v1806 = vld [vmem:[%s1805] sm:$0xf]
        %v1807 = vld [vmem:[%s1805 + $0x4] sm:$0xf]
        %v1808 = vld [vmem:[%s1805 + $0x8] sm:$0xf]
        %v1809 = vld [vmem:[%s1805 + $0xc] sm:$0xf]
        %v1810 = vld [vmem:[%s1805 + $0x10] sm:$0xf]
        %v1811 = vld [vmem:[%s1805 + $0x14] sm:$0xf]
        %v1812 = vld [vmem:[%s1805 + $0x18] sm:$0xf]
        %v1813 = vld [vmem:[%s1805 + $0x1c] sm:$0xf]
        %v1814 = vld [vmem:[%s1805 + $0x20] sm:$0xf]
        %v1815 = vld [vmem:[%s1805 + $0x24] sm:$0xf]
        %v1816 = vld [vmem:[%s1805 + $0x28] sm:$0xf]
        %v1817 = vld [vmem:[%s1805 + $0x2c] sm:$0xf]
        %v1818 = vld [vmem:[%s1805 + $0x30] sm:$0xf]
        %v1819 = vld [vmem:[%s1805 + $0x34] sm:$0xf]
        %v1820 = vld [vmem:[%s1805 + $0x38] sm:$0xf]
        %v1821 = vld [vmem:[%s1805 + $0x3c] sm:$0xf]
        %v1822 = vunpack.c.l.bf16 %v1806
        %v1823 = vunpack.c.l.bf16 %v1807
        %v1824 = vunpack.c.l.bf16 %v1808
        %v1825 = vunpack.c.l.bf16 %v1809
        %v1826 = vunpack.c.l.bf16 %v1810
        %v1827 = vunpack.c.l.bf16 %v1811
        %v1828 = vunpack.c.l.bf16 %v1812
        %v1829 = vunpack.c.l.bf16 %v1813
        %v1830 = vunpack.c.l.bf16 %v1814
        %v1831 = vunpack.c.l.bf16 %v1815
        %v1832 = vunpack.c.l.bf16 %v1816
        %v1833 = vunpack.c.l.bf16 %v1817
        %v1834 = vunpack.c.l.bf16 %v1818
        %v1835 = vunpack.c.l.bf16 %v1819
        %v1836 = vunpack.c.l.bf16 %v1820
        %v1837 = vunpack.c.l.bf16 %v1821
        %v1838 = vadd.f32 %v1787, %v1822
        %v1839 = vadd.f32 %v1788, %v1823
        %v1840 = vadd.f32 %v1789, %v1824
        %v1841 = vadd.f32 %v1790, %v1825
        %v1842 = vadd.f32 %v1791, %v1826
        %v1843 = vadd.f32 %v1792, %v1827
        %v1844 = vadd.f32 %v1793, %v1828
        %v1845 = vadd.f32 %v1794, %v1829
        %v1846 = vadd.f32 %v1795, %v1830
        %v1847 = vadd.f32 %v1796, %v1831
        %v1848 = vadd.f32 %v1797, %v1832
        %v1849 = vadd.f32 %v1798, %v1833
        %v1850 = vadd.f32 %v1799, %v1834
        %v1851 = vadd.f32 %v1800, %v1835
        %v1852 = vadd.f32 %v1801, %v1836
        %v1853 = vadd.f32 %v1802, %v1837
        %1854 = vst [vmem:[%s435] sm:$0xff] %v1838
        %1855 = vst [vmem:[%s435 + $0x8] sm:$0xff] %v1839
        %1856 = vst [vmem:[%s435 + $0x10] sm:$0xff] %v1840
        %1857 = vst [vmem:[%s435 + $0x18] sm:$0xff] %v1841
        %1858 = vst [vmem:[%s435 + $0x20] sm:$0xff] %v1842
        %1859 = vst [vmem:[%s435 + $0x28] sm:$0xff] %v1843
        %1860 = vst [vmem:[%s435 + $0x30] sm:$0xff] %v1844
        %1861 = vst [vmem:[%s435 + $0x38] sm:$0xff] %v1845
        %1862 = vst [vmem:[%s435 + $0x40] sm:$0xff] %v1846
        %1863 = vst [vmem:[%s435 + $0x48] sm:$0xff] %v1847
        %1864 = vst [vmem:[%s435 + $0x50] sm:$0xff] %v1848
        %1865 = vst [vmem:[%s435 + $0x58] sm:$0xff] %v1849
        %1866 = vst [vmem:[%s435 + $0x60] sm:$0xff] %v1850
        %1867 = vst [vmem:[%s435 + $0x68] sm:$0xff] %v1851
        %1868 = vst [vmem:[%s435 + $0x70] sm:$0xff] %v1852
        %1869 = vst [vmem:[%s435 + $0x78] sm:$0xff] %v1853
        %s1870 = sand.u32 %s266, 1
        %s1871 = scalar_lea.sflag [#allocation5], %s1870
        %s1872 = sand.u32 %s266, 1
        %s1873 = smul.addr %s1872, 128
        %s1874 = scalar_lea.vmem [#allocation11], %s1873
        // Predicated region
        $region81: #{tpu_custom_call.1} parent=59 // pred_check
          %p1875 = pneg %p276
        $region82: #{tpu_custom_call.1} parent=59 // pred_check_branch
          %1877 = sbr.rel (%p1875) target = $region84
        $region83: #{tpu_custom_call.1} parent=59 // pred_region
          %s1878 = smul.u32 8, %s34
          %s1880 = ssub.s32 2048, 2048
          %1881 = vsyncadd %s1871, %s1880
          %s1882 = smul.addr %s1878, 2
          %s1883 = smul.addr %s33, 32
          %s1884 = sadd.s32 %s1882, %s1883
          %s1885 = smul.addr %s1884, 128
          %s1886 = scalar_lea.hbm %s10, %s1885
          %s1887 = sshll.u32 %s1874, 4
          %s1888 = int_to_ptr.vmem [resolvable:$true] %s1887
          %1893 = dma.vmem_to_hbm [thread:$0]  %s1888, 2048, %s1886, %s1871, 128, 128, 8
        $region84: #{tpu_custom_call.1} parent=59 // pred_fallthru
          _
      $region60: #{tpu_custom_call.1} parent=5 // pred_fallthru
        _
      %p1894 = scmp.le.s32.totalorder 2, %s24
      // Predicated region
      $region85: #{tpu_custom_call.1} parent=5 // pred_check
        %p1895 = pneg %p1894
      $region86: #{tpu_custom_call.1} parent=5 // pred_check_branch
        %1897 = sbr.rel (%p1895) target = $region88
      $region87: #{tpu_custom_call.1} parent=5 // pred_region
        %s1898 = ssub.s32 %s24, 2
        // Predicated region
        $region89: #{tpu_custom_call.1} parent=87 // pred_check
          %p1899 = pneg %p282
        $region90: #{tpu_custom_call.1} parent=87 // pred_check_branch
          %1901 = sbr.rel (%p1899) target = $region92
        $region91: #{tpu_custom_call.1} parent=87 // pred_region
          %s1902 = sand.u32 %s267, 1
          %s1903 = scalar_lea.sflag [#allocation5], %s1902
          %s1904 = sand.u32 %s267, 1
          %s1905 = smul.addr %s1904, 128
          %s1906 = scalar_lea.vmem [#allocation11], %s1905
          %1907 = dma.done %s1903, 2048
        $region92: #{tpu_custom_call.1} parent=87 // pred_fallthru
          _
      $region88: #{tpu_custom_call.1} parent=5 // pred_fallthru
        _
    $region6: #{tpu_custom_call.1} parent=1 // loop_footer
      %s28 = sadd.s32 1, %s24
    $region7: #{tpu_custom_call.1} parent=1 // loop_footer_branch
      %23 = sbr.rel target = $region3
    $region8: #{tpu_custom_call.1} parent=1 // loop_exit
      _
    %1908 = vsyncpa [#allocation4], 1
    %s1909 = scalar_lea.sflag [#allocation4], 1
    %1910 = vsyncpa %s1909, 1
    %1911 = vsyncpa [#allocation7], 1
    %1912 = vsyncpa [#allocation10], 1
    %1913 = vsyncpa [#allocation5], 1
    %s1914 = scalar_lea.sflag [#allocation5], 1
    %1915 = vsyncpa %s1914, 1

</llo_original>
